<compile_context>
chip_gen: v7x
topology: tpu7x:2x2x1
jax: 0.10.0
libtpu: 0.0.40
codegen_flags: <defaults>
</compile_context>

<pallas_src>
import functools

import jax
import jax.numpy as jnp
from jax.experimental import pallas as pl
from jax.experimental.pallas import tpu as pltpu


# ---------------------------------------------------------------------------
# Diffusion-buffer construction (mirrors gen_diffusion / gen_diffusions).
# Kept in f32: repeated matrix powers in bf16 compound error; only the final
# stack is cast to the kernel compute dtype in the wrapper.
# ---------------------------------------------------------------------------
def gen_diffusions(adj, hops):
    adj_norm = adj / jnp.sum(adj, axis=1, keepdims=True)
    adjs = [adj_norm]
    for _ in range(hops - 1):
        adjs.append(adjs[-1] @ adj_norm)
    return adjs


def gen_diffusion(adj, hops):
    mats = gen_diffusions(adj, hops) + gen_diffusions(adj.T, hops)
    return jnp.stack(mats)  # (2*hops, N, N)


# ---------------------------------------------------------------------------
# Pallas kernel
# ---------------------------------------------------------------------------
def dc_kernel(x_ref, w_ref, b_ref, d_ref, o_ref, *, nodes, feat, feat_pad):
    # x_ref : (TB*N, IN)        bf16  batch block, batch folded into rows
    # w_ref : (IN, (K+1)*FP)    bf16  fused weights [w_lin^T | w_conv^T], 128-lane slabs
    # b_ref : (1, (K+1)*FP)     f32   fused biases, same slab layout
    # d_ref : (K, N, N)         bf16  diffusion stack (VMEM-resident across the grid)
    # o_ref : (TB*N, F)         f32   output rows for this batch block
    tb = o_ref.shape[0] // nodes
    num_k = d_ref.shape[0]

    # Stage 1: one tall fused projection on the MXU, f32 accumulation, f32 bias add.
    mid = (
        jnp.dot(x_ref[...], w_ref[...], preferred_element_type=jnp.float32)
        + b_ref[...]
    )  # (TB*N, (K+1)*FP) f32; slab 0 = skip linear, slab k+1 = diffusion kernel k

    for b in range(tb):  # static, tiny
        mid_b = mid[b * nodes:(b + 1) * nodes]           # sublane-aligned row slab
        # Skip (self.linear) term initializes the accumulator -- no identity matmul.
        acc = mid_b[:, :feat_pad]                         # (N, FP) f32
        for k in range(num_k):  # static, K = 2*hops is tiny
            slab = mid_b[:, (k + 1) * feat_pad:(k + 2) * feat_pad]  # lane-aligned view
            acc = acc + jnp.dot(
                d_ref[k],
                slab.astype(d_ref.dtype),                 # bf16 for MXU rate
                preferred_element_type=jnp.float32,       # f32 accumulation
            )
        o_ref[b * nodes:(b + 1) * nodes, :] = acc[:, :feat].astype(o_ref.dtype)


# ---------------------------------------------------------------------------
# Wrapper
# ---------------------------------------------------------------------------
def _pick_batch_block(batch):
    # Aim for >= 4 grid steps (keeps both v7x TensorCores busy) while still blocking
    # several batch elements per step to keep stage-1's M dimension tall.
    target = max(1, batch // 4)
    for tb in range(target, 0, -1):
        if batch % tb == 0:
            return tb
    return 1


def diffusion_convolution(x, w_lin, b_lin, w_conv, b_conv, diffusion, *,
                          block_b=None, compute_dtype=jnp.bfloat16):
    """x: (B,N,IN); w_lin: (F,IN); b_lin: (F,); w_conv: (K*F,IN); b_conv: (K*F,);
    diffusion: (K,N,N). Returns (B,N,F) float32."""
    B, N, IN = x.shape
    K = diffusion.shape[0]
    F = w_lin.shape[0]
    KT = K + 1
    FP = ((F + 127) // 128) * 128            # pad each slab to a multiple of 128 lanes
    TB = _pick_batch_block(B) if block_b is None else block_b
    assert B % TB == 0, "batch block must divide batch"

    # Fused, slab-padded weights/biases.  linear_conv output channel o = k*F + f, so
    # rows k*F:(k+1)*F of w_conv are diffusion kernel k's weights.
    w_slabs = [w_lin.T] + [w_conv[k * F:(k + 1) * F].T for k in range(K)]
    b_slabs = [b_lin] + [b_conv[k * F:(k + 1) * F] for k in range(K)]
    w_all = jnp.concatenate(
        [jnp.pad(s, ((0, 0), (0, FP - F))) for s in w_slabs], axis=1
    ).astype(compute_dtype)                                      # (IN, KT*FP)
    b_all = jnp.concatenate(
        [jnp.pad(s, (0, FP - F)) for s in b_slabs]
    ).reshape(1, KT * FP).astype(jnp.float32)                    # (1, KT*FP)
    d_all = diffusion.astype(compute_dtype)                      # (K, N, N), no identity
    x2 = x.reshape(B * N, IN).astype(compute_dtype)              # batch folded into rows

    kernel = functools.partial(dc_kernel, nodes=N, feat=F, feat_pad=FP)

    # VMEM budget: resident operands (single copy) + double-buffered x/out blocks +
    # f32 intermediates, with 2x headroom (v5e's default scoped limit is only 16 MiB).
    itemsize = jnp.dtype(compute_dtype).itemsize
    resident = K * N * N * itemsize + IN * KT * FP * itemsize + KT * FP * 4
    streamed = 2 * 2 * (TB * N * IN * itemsize + TB * N * F * 4)
    interm = 2 * TB * N * KT * FP * 4
    vmem_limit = int(min(100 * 2**20, max(32 * 2**20, 2 * (resident + streamed + interm))))

    def call(resident_mode):
        def resident_spec(shape):
            index_map = lambda i, _nd=len(shape): (0,) * _nd
            if resident_mode is None:
                return pl.BlockSpec(shape, index_map)
            return pl.BlockSpec(shape, index_map, pipeline_mode=resident_mode)

        grid_spec = pltpu.PrefetchScalarGridSpec(
            num_scalar_prefetch=0,
            grid=(B // TB,),
            in_specs=[
                pl.BlockSpec((TB * N, IN), lambda i: (i, 0)),    # x rows of this block
                resident_spec((IN, KT * FP)),                    # fused weights (resident)
                resident_spec((1, KT * FP)),                     # fused biases  (resident)
                resident_spec((K, N, N)),                        # diffusion stack (resident)
            ],
            out_specs=pl.BlockSpec((TB * N, F), lambda i: (i, 0)),
        )
        return pl.pallas_call(
            kernel,
            out_shape=jax.ShapeDtypeStruct((B * N, F), jnp.float32),
            grid_spec=grid_spec,
            compiler_params=pltpu.CompilerParams(
                dimension_semantics=("parallel",),
                vmem_limit_bytes=vmem_limit,
            ),
        )(x2, w_all, b_all, d_all)

    try:
        # Single-buffer the constant-index-map operands: avoids a second VMEM copy of
        # the (K, N, N) diffusion stack (matters at production N, esp. on v7x 64 MiB/TC).
        out2 = call(pl.Buffered(1))
    except Exception:
        # Installed JAX without BlockSpec.pipeline_mode support: default double buffering.
        out2 = call(None)

    return out2.reshape(B, N, F)


# ---------------------------------------------------------------------------
# Reference (plain jnp, mirrors the PyTorch forward) for verification
# ---------------------------------------------------------------------------
def reference(x, w_lin, b_lin, w_conv, b_conv, diffusion):
    B, N, _ = x.shape
    K = diffusion.shape[0]
    F = w_lin.shape[0]
    mid = x @ w_conv.T + b_conv                           # (B, N, K*F)
    mid = mid.reshape(B, N, K, F).transpose(0, 2, 1, 3)   # (B, K, N, F)
    diff = jnp.einsum("kmn,bknf->bmf", diffusion, mid)    # matmul + sum over k
    return x @ w_lin.T + b_lin + diff


if __name__ == "__main__":
    B, N, IN, F, hops = 8, 16, 16, 32, 2
    K = 2 * hops

    key = jax.random.PRNGKey(0)
    k1, k2, k3, k4, k5, k6 = jax.random.split(key, 6)

    x = jax.random.normal(k1, (B, N, IN), dtype=jnp.float32)
    # Non-negative adjacency with strictly positive row sums.
    adj = jax.random.uniform(k2, (N, N), dtype=jnp.float32) + jnp.eye(N, dtype=jnp.float32)
    diffusion = gen_diffusion(adj, hops)  # (K, N, N), f32 hop powers

    # nn.Linear parameter shapes: weight (out, in), bias (out,)
    w_lin = 0.1 * jax.random.normal(k3, (F, IN), dtype=jnp.float32)
    b_lin = 0.1 * jax.random.normal(k4, (F,), dtype=jnp.float32)
    w_conv = 0.1 * jax.random.normal(k5, (F * K, IN), dtype=jnp.float32)
    b_conv = 0.1 * jax.random.normal(k6, (F * K,), dtype=jnp.float32)

    out = diffusion_convolution(x, w_lin, b_lin, w_conv, b_conv, diffusion)
    out = jax.block_until_ready(out)
    assert out.shape == (B, N, F)

    # Reference at matched precision (bf16-rounded operands, f32 math): isolates kernel
    # correctness from the intended bf16 quantization of x / weights / diffusion.
    bf = lambda a: a.astype(jnp.bfloat16).astype(jnp.float32)
    ref = reference(bf(x), bf(w_lin), b_lin, bf(w_conv), b_conv, bf(diffusion))
    assert jnp.allclose(out, ref, rtol=1e-2, atol=1e-2), "mismatch vs reference"

    print("KERNEL_OK")
</pallas_src>

<mosaic_0001>
module attributes {stable_mosaic.version = 11 : i64} {
  func.func @dc_kernel(%arg0: i32, %arg1: memref<32x16xbf16, #tpu.memory_space<vmem>>, %arg2: memref<16x640xbf16, #tpu.memory_space<vmem>>, %arg3: memref<1x640xf32, #tpu.memory_space<vmem>>, %arg4: memref<4x16x16xbf16, #tpu.memory_space<vmem>>, %arg5: memref<32x32xf32, #tpu.memory_space<vmem>>) attributes {dimension_semantics = [#tpu.dimension_semantics<parallel>], iteration_bounds = array<i64: 4>, scalar_prefetch = 0 : i64, scratch_operands = 0 : i64, tpu.core_type = #tpu.core_type<tc>, window_params = [{transform_indices = @transform_0, window_bounds = array<i64: 32, 16>}, {pipeline_mode = #tpu.pipeline_mode<synchronous>, transform_indices = @transform_1, window_bounds = array<i64: 16, 640>}, {pipeline_mode = #tpu.pipeline_mode<synchronous>, transform_indices = @transform_2, window_bounds = array<i64: 1, 640>}, {pipeline_mode = #tpu.pipeline_mode<synchronous>, transform_indices = @transform_3, window_bounds = array<i64: 4, 16, 16>}, {transform_indices = @transform_4, window_bounds = array<i64: 32, 32>}]} {
    %c0 = arith.constant 0 : index
    %c0_0 = arith.constant 0 : index
    %0 = vector.load %arg1[%c0, %c0_0] : memref<32x16xbf16, #tpu.memory_space<vmem>>, vector<32x16xbf16>
    %c0_1 = arith.constant 0 : index
    %c0_2 = arith.constant 0 : index
    %1 = vector.load %arg2[%c0_1, %c0_2] : memref<16x640xbf16, #tpu.memory_space<vmem>>, vector<16x640xbf16>
    %cst = arith.constant dense<0.000000e+00> : vector<32x640xf32>
    %2 = tpu.matmul %0, %1, %cst {dimension_numbers = #tpu.dot_dimension_numbers<[1], [0], [0], [1], [0, 0, 1, 1], [], []>} : vector<32x16xbf16>, vector<16x640xbf16>, vector<32x640xf32> -> vector<32x640xf32>
    %c0_3 = arith.constant 0 : index
    %c0_4 = arith.constant 0 : index
    %3 = vector.load %arg3[%c0_3, %c0_4] : memref<1x640xf32, #tpu.memory_space<vmem>>, vector<1x640xf32>
    %4 = vector.broadcast %3 : vector<1x640xf32> to vector<32x640xf32>
    %5 = arith.addf %2, %4 : vector<32x640xf32>
    %6 = vector.extract_strided_slice %5 {offsets = [0, 0], sizes = [16, 640], strides = [1, 1]} : vector<32x640xf32> to vector<16x640xf32>
    %7 = vector.extract_strided_slice %6 {offsets = [0, 0], sizes = [16, 128], strides = [1, 1]} : vector<16x640xf32> to vector<16x128xf32>
    %8 = vector.extract_strided_slice %6 {offsets = [0, 128], sizes = [16, 128], strides = [1, 1]} : vector<16x640xf32> to vector<16x128xf32>
    %c0_5 = arith.constant 0 : index
    %c0_6 = arith.constant 0 : index
    %c0_7 = arith.constant 0 : index
    %9 = vector.load %arg4[%c0_5, %c0_6, %c0_7] : memref<4x16x16xbf16, #tpu.memory_space<vmem>>, vector<1x16x16xbf16>
    %10 = vector.shape_cast %9 : vector<1x16x16xbf16> to vector<16x16xbf16>
    %11 = arith.truncf %8 : vector<16x128xf32> to vector<16x128xbf16>
    %cst_8 = arith.constant dense<0.000000e+00> : vector<16x128xf32>
    %12 = tpu.matmul %10, %11, %cst_8 {dimension_numbers = #tpu.dot_dimension_numbers<[1], [0], [0], [1], [0, 0, 1, 1], [], []>} : vector<16x16xbf16>, vector<16x128xbf16>, vector<16x128xf32> -> vector<16x128xf32>
    %13 = arith.addf %7, %12 : vector<16x128xf32>
    %14 = vector.extract_strided_slice %6 {offsets = [0, 256], sizes = [16, 128], strides = [1, 1]} : vector<16x640xf32> to vector<16x128xf32>
    %c1 = arith.constant 1 : index
    %c0_9 = arith.constant 0 : index
    %c0_10 = arith.constant 0 : index
    %15 = vector.load %arg4[%c1, %c0_9, %c0_10] : memref<4x16x16xbf16, #tpu.memory_space<vmem>>, vector<1x16x16xbf16>
    %16 = vector.shape_cast %15 : vector<1x16x16xbf16> to vector<16x16xbf16>
    %17 = arith.truncf %14 : vector<16x128xf32> to vector<16x128xbf16>
    %cst_11 = arith.constant dense<0.000000e+00> : vector<16x128xf32>
    %18 = tpu.matmul %16, %17, %cst_11 {dimension_numbers = #tpu.dot_dimension_numbers<[1], [0], [0], [1], [0, 0, 1, 1], [], []>} : vector<16x16xbf16>, vector<16x128xbf16>, vector<16x128xf32> -> vector<16x128xf32>
    %19 = arith.addf %13, %18 : vector<16x128xf32>
    %20 = vector.extract_strided_slice %6 {offsets = [0, 384], sizes = [16, 128], strides = [1, 1]} : vector<16x640xf32> to vector<16x128xf32>
    %c2 = arith.constant 2 : index
    %c0_12 = arith.constant 0 : index
    %c0_13 = arith.constant 0 : index
    %21 = vector.load %arg4[%c2, %c0_12, %c0_13] : memref<4x16x16xbf16, #tpu.memory_space<vmem>>, vector<1x16x16xbf16>
    %22 = vector.shape_cast %21 : vector<1x16x16xbf16> to vector<16x16xbf16>
    %23 = arith.truncf %20 : vector<16x128xf32> to vector<16x128xbf16>
    %cst_14 = arith.constant dense<0.000000e+00> : vector<16x128xf32>
    %24 = tpu.matmul %22, %23, %cst_14 {dimension_numbers = #tpu.dot_dimension_numbers<[1], [0], [0], [1], [0, 0, 1, 1], [], []>} : vector<16x16xbf16>, vector<16x128xbf16>, vector<16x128xf32> -> vector<16x128xf32>
    %25 = arith.addf %19, %24 : vector<16x128xf32>
    %26 = vector.extract_strided_slice %6 {offsets = [0, 512], sizes = [16, 128], strides = [1, 1]} : vector<16x640xf32> to vector<16x128xf32>
    %c3 = arith.constant 3 : index
    %c0_15 = arith.constant 0 : index
    %c0_16 = arith.constant 0 : index
    %27 = vector.load %arg4[%c3, %c0_15, %c0_16] : memref<4x16x16xbf16, #tpu.memory_space<vmem>>, vector<1x16x16xbf16>
    %28 = vector.shape_cast %27 : vector<1x16x16xbf16> to vector<16x16xbf16>
    %29 = arith.truncf %26 : vector<16x128xf32> to vector<16x128xbf16>
    %cst_17 = arith.constant dense<0.000000e+00> : vector<16x128xf32>
    %30 = tpu.matmul %28, %29, %cst_17 {dimension_numbers = #tpu.dot_dimension_numbers<[1], [0], [0], [1], [0, 0, 1, 1], [], []>} : vector<16x16xbf16>, vector<16x128xbf16>, vector<16x128xf32> -> vector<16x128xf32>
    %31 = arith.addf %25, %30 : vector<16x128xf32>
    %32 = vector.extract_strided_slice %31 {offsets = [0, 0], sizes = [16, 32], strides = [1, 1]} : vector<16x128xf32> to vector<16x32xf32>
    %c0_18 = arith.constant 0 : index
    %c0_19 = arith.constant 0 : index
    %33 = vector.load %arg5[%c0_18, %c0_19] : memref<32x32xf32, #tpu.memory_space<vmem>>, vector<16x32xf32>
    tpu.vector_store %arg5[%c0_18, %c0_19], %32 {strides = array<i32>} : memref<32x32xf32, #tpu.memory_space<vmem>>, vector<16x32xf32>,
    %34 = vector.extract_strided_slice %5 {offsets = [16, 0], sizes = [16, 640], strides = [1, 1]} : vector<32x640xf32> to vector<16x640xf32>
    %35 = vector.extract_strided_slice %34 {offsets = [0, 0], sizes = [16, 128], strides = [1, 1]} : vector<16x640xf32> to vector<16x128xf32>
    %36 = vector.extract_strided_slice %34 {offsets = [0, 128], sizes = [16, 128], strides = [1, 1]} : vector<16x640xf32> to vector<16x128xf32>
    %c0_20 = arith.constant 0 : index
    %c0_21 = arith.constant 0 : index
    %c0_22 = arith.constant 0 : index
    %37 = vector.load %arg4[%c0_20, %c0_21, %c0_22] : memref<4x16x16xbf16, #tpu.memory_space<vmem>>, vector<1x16x16xbf16>
    %38 = vector.shape_cast %37 : vector<1x16x16xbf16> to vector<16x16xbf16>
    %39 = arith.truncf %36 : vector<16x128xf32> to vector<16x128xbf16>
    %cst_23 = arith.constant dense<0.000000e+00> : vector<16x128xf32>
    %40 = tpu.matmul %38, %39, %cst_23 {dimension_numbers = #tpu.dot_dimension_numbers<[1], [0], [0], [1], [0, 0, 1, 1], [], []>} : vector<16x16xbf16>, vector<16x128xbf16>, vector<16x128xf32> -> vector<16x128xf32>
    %41 = arith.addf %35, %40 : vector<16x128xf32>
    %42 = vector.extract_strided_slice %34 {offsets = [0, 256], sizes = [16, 128], strides = [1, 1]} : vector<16x640xf32> to vector<16x128xf32>
    %c1_24 = arith.constant 1 : index
    %c0_25 = arith.constant 0 : index
    %c0_26 = arith.constant 0 : index
    %43 = vector.load %arg4[%c1_24, %c0_25, %c0_26] : memref<4x16x16xbf16, #tpu.memory_space<vmem>>, vector<1x16x16xbf16>
    %44 = vector.shape_cast %43 : vector<1x16x16xbf16> to vector<16x16xbf16>
    %45 = arith.truncf %42 : vector<16x128xf32> to vector<16x128xbf16>
    %cst_27 = arith.constant dense<0.000000e+00> : vector<16x128xf32>
    %46 = tpu.matmul %44, %45, %cst_27 {dimension_numbers = #tpu.dot_dimension_numbers<[1], [0], [0], [1], [0, 0, 1, 1], [], []>} : vector<16x16xbf16>, vector<16x128xbf16>, vector<16x128xf32> -> vector<16x128xf32>
    %47 = arith.addf %41, %46 : vector<16x128xf32>
    %48 = vector.extract_strided_slice %34 {offsets = [0, 384], sizes = [16, 128], strides = [1, 1]} : vector<16x640xf32> to vector<16x128xf32>
    %c2_28 = arith.constant 2 : index
    %c0_29 = arith.constant 0 : index
    %c0_30 = arith.constant 0 : index
    %49 = vector.load %arg4[%c2_28, %c0_29, %c0_30] : memref<4x16x16xbf16, #tpu.memory_space<vmem>>, vector<1x16x16xbf16>
    %50 = vector.shape_cast %49 : vector<1x16x16xbf16> to vector<16x16xbf16>
    %51 = arith.truncf %48 : vector<16x128xf32> to vector<16x128xbf16>
    %cst_31 = arith.constant dense<0.000000e+00> : vector<16x128xf32>
    %52 = tpu.matmul %50, %51, %cst_31 {dimension_numbers = #tpu.dot_dimension_numbers<[1], [0], [0], [1], [0, 0, 1, 1], [], []>} : vector<16x16xbf16>, vector<16x128xbf16>, vector<16x128xf32> -> vector<16x128xf32>
    %53 = arith.addf %47, %52 : vector<16x128xf32>
    %54 = vector.extract_strided_slice %34 {offsets = [0, 512], sizes = [16, 128], strides = [1, 1]} : vector<16x640xf32> to vector<16x128xf32>
    %c3_32 = arith.constant 3 : index
    %c0_33 = arith.constant 0 : index
    %c0_34 = arith.constant 0 : index
    %55 = vector.load %arg4[%c3_32, %c0_33, %c0_34] : memref<4x16x16xbf16, #tpu.memory_space<vmem>>, vector<1x16x16xbf16>
    %56 = vector.shape_cast %55 : vector<1x16x16xbf16> to vector<16x16xbf16>
    %57 = arith.truncf %54 : vector<16x128xf32> to vector<16x128xbf16>
    %cst_35 = arith.constant dense<0.000000e+00> : vector<16x128xf32>
    %58 = tpu.matmul %56, %57, %cst_35 {dimension_numbers = #tpu.dot_dimension_numbers<[1], [0], [0], [1], [0, 0, 1, 1], [], []>} : vector<16x16xbf16>, vector<16x128xbf16>, vector<16x128xf32> -> vector<16x128xf32>
    %59 = arith.addf %53, %58 : vector<16x128xf32>
    %60 = vector.extract_strided_slice %59 {offsets = [0, 0], sizes = [16, 32], strides = [1, 1]} : vector<16x128xf32> to vector<16x32xf32>
    %c16 = arith.constant 16 : index
    %c0_36 = arith.constant 0 : index
    %61 = vector.load %arg5[%c16, %c0_36] : memref<32x32xf32, #tpu.memory_space<vmem>>, vector<16x32xf32>
    tpu.vector_store %arg5[%c16, %c0_36], %60 {strides = array<i32>} : memref<32x32xf32, #tpu.memory_space<vmem>>, vector<16x32xf32>,
    return
  }
  func.func @transform_0(%arg0: i32) -> (i32, i32) {
    %c0_i32 = arith.constant 0 : i32
    %c0_i32_0 = arith.constant 0 : i32
    return %arg0, %c0_i32 : i32, i32
  }
  func.func @transform_1(%arg0: i32) -> (i32, i32) {
    %c0_i32 = arith.constant 0 : i32
    %c0_i32_0 = arith.constant 0 : i32
    %c0_i32_1 = arith.constant 0 : i32
    return %c0_i32, %c0_i32_0 : i32, i32
  }
  func.func @transform_2(%arg0: i32) -> (i32, i32) {
    %c0_i32 = arith.constant 0 : i32
    %c0_i32_0 = arith.constant 0 : i32
    %c0_i32_1 = arith.constant 0 : i32
    return %c0_i32, %c0_i32_0 : i32, i32
  }
  func.func @transform_3(%arg0: i32) -> (i32, i32, i32) {
    %c0_i32 = arith.constant 0 : i32
    %c0_i32_0 = arith.constant 0 : i32
    %c0_i32_1 = arith.constant 0 : i32
    %c0_i32_2 = arith.constant 0 : i32
    return %c0_i32, %c0_i32_0, %c0_i32_1 : i32, i32, i32
  }
  func.func @transform_4(%arg0: i32) -> (i32, i32) {
    %c0_i32 = arith.constant 0 : i32
    %c0_i32_0 = arith.constant 0 : i32
    return %arg0, %c0_i32 : i32, i32
  }
}

module attributes {stable_mosaic.version = 11 : i64} {
  func.func @dc_kernel(%arg0: i32, %arg1: memref<32x16xbf16, #tpu.memory_space<vmem>>, %arg2: memref<16x640xbf16, #tpu.memory_space<vmem>>, %arg3: memref<1x640xf32, #tpu.memory_space<vmem>>, %arg4: memref<4x16x16xbf16, #tpu.memory_space<vmem>>, %arg5: memref<32x32xf32, #tpu.memory_space<vmem>>) attributes {dimension_semantics = [#tpu.dimension_semantics<parallel>], iteration_bounds = array<i64: 4>, scalar_prefetch = 0 : i64, scratch_operands = 0 : i64, tpu.core_type = #tpu.core_type<tc>, window_params = [{transform_indices = @transform_0, window_bounds = array<i64: 32, 16>}, {pipeline_mode = #tpu.pipeline_mode<synchronous>, transform_indices = @transform_1, window_bounds = array<i64: 16, 640>}, {pipeline_mode = #tpu.pipeline_mode<synchronous>, transform_indices = @transform_2, window_bounds = array<i64: 1, 640>}, {pipeline_mode = #tpu.pipeline_mode<synchronous>, transform_indices = @transform_3, window_bounds = array<i64: 4, 16, 16>}, {transform_indices = @transform_4, window_bounds = array<i64: 32, 32>}]} {
    %c0 = arith.constant 0 : index
    %c0_0 = arith.constant 0 : index
    %0 = vector.load %arg1[%c0, %c0_0] : memref<32x16xbf16, #tpu.memory_space<vmem>>, vector<32x16xbf16>
    %c0_1 = arith.constant 0 : index
    %c0_2 = arith.constant 0 : index
    %1 = vector.load %arg2[%c0_1, %c0_2] : memref<16x640xbf16, #tpu.memory_space<vmem>>, vector<16x640xbf16>
    %cst = arith.constant dense<0.000000e+00> : vector<32x640xf32>
    %2 = tpu.matmul %0, %1, %cst {dimension_numbers = #tpu.dot_dimension_numbers<[1], [0], [0], [1], [0, 0, 1, 1], [], []>} : vector<32x16xbf16>, vector<16x640xbf16>, vector<32x640xf32> -> vector<32x640xf32>
    %c0_3 = arith.constant 0 : index
    %c0_4 = arith.constant 0 : index
    %3 = vector.load %arg3[%c0_3, %c0_4] : memref<1x640xf32, #tpu.memory_space<vmem>>, vector<1x640xf32>
    %4 = vector.broadcast %3 : vector<1x640xf32> to vector<32x640xf32>
    %5 = arith.addf %2, %4 : vector<32x640xf32>
    %6 = vector.extract_strided_slice %5 {offsets = [0, 0], sizes = [16, 640], strides = [1, 1]} : vector<32x640xf32> to vector<16x640xf32>
    %7 = vector.extract_strided_slice %6 {offsets = [0, 0], sizes = [16, 128], strides = [1, 1]} : vector<16x640xf32> to vector<16x128xf32>
    %8 = vector.extract_strided_slice %6 {offsets = [0, 128], sizes = [16, 128], strides = [1, 1]} : vector<16x640xf32> to vector<16x128xf32>
    %c0_5 = arith.constant 0 : index
    %c0_6 = arith.constant 0 : index
    %c0_7 = arith.constant 0 : index
    %9 = vector.load %arg4[%c0_5, %c0_6, %c0_7] : memref<4x16x16xbf16, #tpu.memory_space<vmem>>, vector<1x16x16xbf16>
    %10 = vector.shape_cast %9 : vector<1x16x16xbf16> to vector<16x16xbf16>
    %11 = arith.truncf %8 : vector<16x128xf32> to vector<16x128xbf16>
    %cst_8 = arith.constant dense<0.000000e+00> : vector<16x128xf32>
    %12 = tpu.matmul %10, %11, %cst_8 {dimension_numbers = #tpu.dot_dimension_numbers<[1], [0], [0], [1], [0, 0, 1, 1], [], []>} : vector<16x16xbf16>, vector<16x128xbf16>, vector<16x128xf32> -> vector<16x128xf32>
    %13 = arith.addf %7, %12 : vector<16x128xf32>
    %14 = vector.extract_strided_slice %6 {offsets = [0, 256], sizes = [16, 128], strides = [1, 1]} : vector<16x640xf32> to vector<16x128xf32>
    %c1 = arith.constant 1 : index
    %c0_9 = arith.constant 0 : index
    %c0_10 = arith.constant 0 : index
    %15 = vector.load %arg4[%c1, %c0_9, %c0_10] : memref<4x16x16xbf16, #tpu.memory_space<vmem>>, vector<1x16x16xbf16>
    %16 = vector.shape_cast %15 : vector<1x16x16xbf16> to vector<16x16xbf16>
    %17 = arith.truncf %14 : vector<16x128xf32> to vector<16x128xbf16>
    %cst_11 = arith.constant dense<0.000000e+00> : vector<16x128xf32>
    %18 = tpu.matmul %16, %17, %cst_11 {dimension_numbers = #tpu.dot_dimension_numbers<[1], [0], [0], [1], [0, 0, 1, 1], [], []>} : vector<16x16xbf16>, vector<16x128xbf16>, vector<16x128xf32> -> vector<16x128xf32>
    %19 = arith.addf %13, %18 : vector<16x128xf32>
    %20 = vector.extract_strided_slice %6 {offsets = [0, 384], sizes = [16, 128], strides = [1, 1]} : vector<16x640xf32> to vector<16x128xf32>
    %c2 = arith.constant 2 : index
    %c0_12 = arith.constant 0 : index
    %c0_13 = arith.constant 0 : index
    %21 = vector.load %arg4[%c2, %c0_12, %c0_13] : memref<4x16x16xbf16, #tpu.memory_space<vmem>>, vector<1x16x16xbf16>
    %22 = vector.shape_cast %21 : vector<1x16x16xbf16> to vector<16x16xbf16>
    %23 = arith.truncf %20 : vector<16x128xf32> to vector<16x128xbf16>
    %cst_14 = arith.constant dense<0.000000e+00> : vector<16x128xf32>
    %24 = tpu.matmul %22, %23, %cst_14 {dimension_numbers = #tpu.dot_dimension_numbers<[1], [0], [0], [1], [0, 0, 1, 1], [], []>} : vector<16x16xbf16>, vector<16x128xbf16>, vector<16x128xf32> -> vector<16x128xf32>
    %25 = arith.addf %19, %24 : vector<16x128xf32>
    %26 = vector.extract_strided_slice %6 {offsets = [0, 512], sizes = [16, 128], strides = [1, 1]} : vector<16x640xf32> to vector<16x128xf32>
    %c3 = arith.constant 3 : index
    %c0_15 = arith.constant 0 : index
    %c0_16 = arith.constant 0 : index
    %27 = vector.load %arg4[%c3, %c0_15, %c0_16] : memref<4x16x16xbf16, #tpu.memory_space<vmem>>, vector<1x16x16xbf16>
    %28 = vector.shape_cast %27 : vector<1x16x16xbf16> to vector<16x16xbf16>
    %29 = arith.truncf %26 : vector<16x128xf32> to vector<16x128xbf16>
    %cst_17 = arith.constant dense<0.000000e+00> : vector<16x128xf32>
    %30 = tpu.matmul %28, %29, %cst_17 {dimension_numbers = #tpu.dot_dimension_numbers<[1], [0], [0], [1], [0, 0, 1, 1], [], []>} : vector<16x16xbf16>, vector<16x128xbf16>, vector<16x128xf32> -> vector<16x128xf32>
    %31 = arith.addf %25, %30 : vector<16x128xf32>
    %32 = vector.extract_strided_slice %31 {offsets = [0, 0], sizes = [16, 32], strides = [1, 1]} : vector<16x128xf32> to vector<16x32xf32>
    %c0_18 = arith.constant 0 : index
    %c0_19 = arith.constant 0 : index
    %33 = vector.load %arg5[%c0_18, %c0_19] : memref<32x32xf32, #tpu.memory_space<vmem>>, vector<16x32xf32>
    tpu.vector_store %arg5[%c0_18, %c0_19], %32 {strides = array<i32>} : memref<32x32xf32, #tpu.memory_space<vmem>>, vector<16x32xf32>,
    %34 = vector.extract_strided_slice %5 {offsets = [16, 0], sizes = [16, 640], strides = [1, 1]} : vector<32x640xf32> to vector<16x640xf32>
    %35 = vector.extract_strided_slice %34 {offsets = [0, 0], sizes = [16, 128], strides = [1, 1]} : vector<16x640xf32> to vector<16x128xf32>
    %36 = vector.extract_strided_slice %34 {offsets = [0, 128], sizes = [16, 128], strides = [1, 1]} : vector<16x640xf32> to vector<16x128xf32>
    %c0_20 = arith.constant 0 : index
    %c0_21 = arith.constant 0 : index
    %c0_22 = arith.constant 0 : index
    %37 = vector.load %arg4[%c0_20, %c0_21, %c0_22] : memref<4x16x16xbf16, #tpu.memory_space<vmem>>, vector<1x16x16xbf16>
    %38 = vector.shape_cast %37 : vector<1x16x16xbf16> to vector<16x16xbf16>
    %39 = arith.truncf %36 : vector<16x128xf32> to vector<16x128xbf16>
    %cst_23 = arith.constant dense<0.000000e+00> : vector<16x128xf32>
    %40 = tpu.matmul %38, %39, %cst_23 {dimension_numbers = #tpu.dot_dimension_numbers<[1], [0], [0], [1], [0, 0, 1, 1], [], []>} : vector<16x16xbf16>, vector<16x128xbf16>, vector<16x128xf32> -> vector<16x128xf32>
    %41 = arith.addf %35, %40 : vector<16x128xf32>
    %42 = vector.extract_strided_slice %34 {offsets = [0, 256], sizes = [16, 128], strides = [1, 1]} : vector<16x640xf32> to vector<16x128xf32>
    %c1_24 = arith.constant 1 : index
    %c0_25 = arith.constant 0 : index
    %c0_26 = arith.constant 0 : index
    %43 = vector.load %arg4[%c1_24, %c0_25, %c0_26] : memref<4x16x16xbf16, #tpu.memory_space<vmem>>, vector<1x16x16xbf16>
    %44 = vector.shape_cast %43 : vector<1x16x16xbf16> to vector<16x16xbf16>
    %45 = arith.truncf %42 : vector<16x128xf32> to vector<16x128xbf16>
    %cst_27 = arith.constant dense<0.000000e+00> : vector<16x128xf32>
    %46 = tpu.matmul %44, %45, %cst_27 {dimension_numbers = #tpu.dot_dimension_numbers<[1], [0], [0], [1], [0, 0, 1, 1], [], []>} : vector<16x16xbf16>, vector<16x128xbf16>, vector<16x128xf32> -> vector<16x128xf32>
    %47 = arith.addf %41, %46 : vector<16x128xf32>
    %48 = vector.extract_strided_slice %34 {offsets = [0, 384], sizes = [16, 128], strides = [1, 1]} : vector<16x640xf32> to vector<16x128xf32>
    %c2_28 = arith.constant 2 : index
    %c0_29 = arith.constant 0 : index
    %c0_30 = arith.constant 0 : index
    %49 = vector.load %arg4[%c2_28, %c0_29, %c0_30] : memref<4x16x16xbf16, #tpu.memory_space<vmem>>, vector<1x16x16xbf16>
    %50 = vector.shape_cast %49 : vector<1x16x16xbf16> to vector<16x16xbf16>
    %51 = arith.truncf %48 : vector<16x128xf32> to vector<16x128xbf16>
    %cst_31 = arith.constant dense<0.000000e+00> : vector<16x128xf32>
    %52 = tpu.matmul %50, %51, %cst_31 {dimension_numbers = #tpu.dot_dimension_numbers<[1], [0], [0], [1], [0, 0, 1, 1], [], []>} : vector<16x16xbf16>, vector<16x128xbf16>, vector<16x128xf32> -> vector<16x128xf32>
    %53 = arith.addf %47, %52 : vector<16x128xf32>
    %54 = vector.extract_strided_slice %34 {offsets = [0, 512], sizes = [16, 128], strides = [1, 1]} : vector<16x640xf32> to vector<16x128xf32>
    %c3_32 = arith.constant 3 : index
    %c0_33 = arith.constant 0 : index
    %c0_34 = arith.constant 0 : index
    %55 = vector.load %arg4[%c3_32, %c0_33, %c0_34] : memref<4x16x16xbf16, #tpu.memory_space<vmem>>, vector<1x16x16xbf16>
    %56 = vector.shape_cast %55 : vector<1x16x16xbf16> to vector<16x16xbf16>
    %57 = arith.truncf %54 : vector<16x128xf32> to vector<16x128xbf16>
    %cst_35 = arith.constant dense<0.000000e+00> : vector<16x128xf32>
    %58 = tpu.matmul %56, %57, %cst_35 {dimension_numbers = #tpu.dot_dimension_numbers<[1], [0], [0], [1], [0, 0, 1, 1], [], []>} : vector<16x16xbf16>, vector<16x128xbf16>, vector<16x128xf32> -> vector<16x128xf32>
    %59 = arith.addf %53, %58 : vector<16x128xf32>
    %60 = vector.extract_strided_slice %59 {offsets = [0, 0], sizes = [16, 32], strides = [1, 1]} : vector<16x128xf32> to vector<16x32xf32>
    %c16 = arith.constant 16 : index
    %c0_36 = arith.constant 0 : index
    %61 = vector.load %arg5[%c16, %c0_36] : memref<32x32xf32, #tpu.memory_space<vmem>>, vector<16x32xf32>
    tpu.vector_store %arg5[%c16, %c0_36], %60 {strides = array<i32>} : memref<32x32xf32, #tpu.memory_space<vmem>>, vector<16x32xf32>,
    return
  }
  func.func @transform_0(%arg0: i32) -> (i32, i32) {
    %c0_i32 = arith.constant 0 : i32
    %c0_i32_0 = arith.constant 0 : i32
    return %arg0, %c0_i32 : i32, i32
  }
  func.func @transform_1(%arg0: i32) -> (i32, i32) {
    %c0_i32 = arith.constant 0 : i32
    %c0_i32_0 = arith.constant 0 : i32
    %c0_i32_1 = arith.constant 0 : i32
    return %c0_i32, %c0_i32_0 : i32, i32
  }
  func.func @transform_2(%arg0: i32) -> (i32, i32) {
    %c0_i32 = arith.constant 0 : i32
    %c0_i32_0 = arith.constant 0 : i32
    %c0_i32_1 = arith.constant 0 : i32
    return %c0_i32, %c0_i32_0 : i32, i32
  }
  func.func @transform_3(%arg0: i32) -> (i32, i32, i32) {
    %c0_i32 = arith.constant 0 : i32
    %c0_i32_0 = arith.constant 0 : i32
    %c0_i32_1 = arith.constant 0 : i32
    %c0_i32_2 = arith.constant 0 : i32
    return %c0_i32, %c0_i32_0, %c0_i32_1 : i32, i32, i32
  }
  func.func @transform_4(%arg0: i32) -> (i32, i32) {
    %c0_i32 = arith.constant 0 : i32
    %c0_i32_0 = arith.constant 0 : i32
    return %arg0, %c0_i32 : i32, i32
  }
}

</mosaic_0001>

<llo_original>
// kernel: tpu_custom_call.1
$region0: #{tpu_custom_call.1}
  #allocation0 [shape = 'u32[]', space=smem, size = 0x4, offset = 0x4, fixed_abs, tag = 'smem constant byte address 0x4 - core index']
  #allocation1 [shape = 'u32[144,128]{1,0:T(1,128)}', space=vmem, size = 0x12000, scoped, tag = 'internal scratch']
  %s0 = inlined_call_operand.vmem [shape: bf16[128,16], index: 0, kind: input, shape index: {}]
  %s1 = inlined_call_operand.vmem [shape: bf16[16,640], index: 1, kind: input, shape index: {}]
  %s2 = inlined_call_operand.vmem [shape: f32[1,640], index: 2, kind: input, shape index: {}]
  %s3 = inlined_call_operand.vmem [shape: bf16[4,16,16], index: 3, kind: input, shape index: {}]
  %s4 = inlined_call_operand.vmem [shape: f32[128,32], index: 4, kind: output, shape index: {}]
  %s5 = sld [smem:[#allocation0]]
  $region49: #{tpu_custom_call.1} parent=0
    _
  %s7 = ssub.s32 1, %s5
  %s8 = scalar_select 0, %s7, %s5
  loop: start=0, step=1, limit=6
  $region2: #{tpu_custom_call.1} parent=0 // loop_pre_header
    _
  $region3: #{tpu_custom_call.1} parent=0 // loop_header
    %s10 = sphi 0, %s14
    %p11 = scmp.ge.s32.totalorder %s10, 6
    %s20 = sphi 0, %s22
    %s23 = sphi 0, %s20
    %s24 = sphi 0, %s23
    %s40 = sphi 0, %s24
    %s44 = sphi 0, %s44
    %s46 = sphi 0, %s44
    %s47 = sphi 0, %s46
    %s61 = sphi 0, %s47
    %s65 = sphi 0, %s65
    %s67 = sphi 0, %s65
    %s68 = sphi 0, %s67
    %s82 = sphi 0, %s68
    %s86 = sphi 0, %s86
    %s88 = sphi 0, %s86
    %s89 = sphi 0, %s88
    %s103 = sphi 0, %s89
    %s109 = sphi 0, %s111
    %s112 = sphi 0, %s109
    %s113 = sphi 0, %s112
    %s129 = sphi 0, %s113
  $region4: #{tpu_custom_call.1} parent=0 // loop_header_branch
    %13 = sbr.rel (%p11) target = $region8
  $region5: #{tpu_custom_call.1} parent=0 // loop_body
    %s15 = ssub.s32 %s10, 1
    %s16 = ssub.s32 %s10, 2
    %s17 = sadd.s32 %s10, 1
    %s18 = ssub.s32 %s10, %s17
    %p19 = scmp.eq.s32.totalorder %s18, 0
    %s21 = sadd.s32 %s20, 1
    %s22 = scalar_select %p19, %s20, %s21
    %p25 = pneg %p19
    %p26 = scmp.eq.s32.totalorder %s10, 3
    %p27 = por %p25, %p26
    %p28 = scmp.ne.s32.totalorder %s20, %s23
    %p29 = scmp.eq.s32.totalorder %s10, 0
    %p30 = por %p28, %p29
    %p31 = scmp.ne.s32.totalorder %s20, %s23
    %p32 = scmp.eq.s32.totalorder %s15, 3
    %p33 = por %p31, %p32
    %p34 = scmp.ne.s32.totalorder %s23, %s24
    %p35 = scmp.eq.s32.totalorder %s15, 0
    %p36 = por %p34, %p35
    %p37 = scmp.ne.s32.totalorder %s23, %s24
    %p38 = scmp.eq.s32.totalorder %s16, 3
    %p39 = por %p37, %p38
    %p41 = scmp.ne.s32.totalorder %s24, %s40
    %p42 = scmp.eq.s32.totalorder %s16, 0
    %p43 = por %p41, %p42
    %s45 = sadd.s32 %s44, 1
    %p48 = scmp.eq.s32.totalorder %s10, 3
    %p49 = scmp.ne.s32.totalorder %s44, %s46
    %p50 = scmp.eq.s32.totalorder %s10, 0
    %p51 = por %p49, %p50
    %p52 = scmp.ne.s32.totalorder %s44, %s46
    %p53 = scmp.eq.s32.totalorder %s15, 3
    %p54 = por %p52, %p53
    %p55 = scmp.ne.s32.totalorder %s46, %s47
    %p56 = scmp.eq.s32.totalorder %s15, 0
    %p57 = por %p55, %p56
    %p58 = scmp.ne.s32.totalorder %s46, %s47
    %p59 = scmp.eq.s32.totalorder %s16, 3
    %p60 = por %p58, %p59
    %p62 = scmp.ne.s32.totalorder %s47, %s61
    %p63 = scmp.eq.s32.totalorder %s16, 0
    %p64 = por %p62, %p63
    %s66 = sadd.s32 %s65, 1
    %p69 = scmp.eq.s32.totalorder %s10, 3
    %p70 = scmp.ne.s32.totalorder %s65, %s67
    %p71 = scmp.eq.s32.totalorder %s10, 0
    %p72 = por %p70, %p71
    %p73 = scmp.ne.s32.totalorder %s65, %s67
    %p74 = scmp.eq.s32.totalorder %s15, 3
    %p75 = por %p73, %p74
    %p76 = scmp.ne.s32.totalorder %s67, %s68
    %p77 = scmp.eq.s32.totalorder %s15, 0
    %p78 = por %p76, %p77
    %p79 = scmp.ne.s32.totalorder %s67, %s68
    %p80 = scmp.eq.s32.totalorder %s16, 3
    %p81 = por %p79, %p80
    %p83 = scmp.ne.s32.totalorder %s68, %s82
    %p84 = scmp.eq.s32.totalorder %s16, 0
    %p85 = por %p83, %p84
    %s87 = sadd.s32 %s86, 1
    %p90 = scmp.eq.s32.totalorder %s10, 3
    %p91 = scmp.ne.s32.totalorder %s86, %s88
    %p92 = scmp.eq.s32.totalorder %s10, 0
    %p93 = por %p91, %p92
    %p94 = scmp.ne.s32.totalorder %s86, %s88
    %p95 = scmp.eq.s32.totalorder %s15, 3
    %p96 = por %p94, %p95
    %p97 = scmp.ne.s32.totalorder %s88, %s89
    %p98 = scmp.eq.s32.totalorder %s15, 0
    %p99 = por %p97, %p98
    %p100 = scmp.ne.s32.totalorder %s88, %s89
    %p101 = scmp.eq.s32.totalorder %s16, 3
    %p102 = por %p100, %p101
    %p104 = scmp.ne.s32.totalorder %s89, %s103
    %p105 = scmp.eq.s32.totalorder %s16, 0
    %p106 = por %p104, %p105
    %s107 = ssub.s32 %s10, %s17
    %p108 = scmp.eq.s32.totalorder %s107, 0
    %s110 = sadd.s32 %s109, 1
    %s111 = scalar_select %p108, %s109, %s110
    %p114 = pneg %p108
    %p115 = scmp.eq.s32.totalorder %s10, 3
    %p116 = por %p114, %p115
    %p117 = scmp.ne.s32.totalorder %s109, %s112
    %p118 = scmp.eq.s32.totalorder %s10, 0
    %p119 = por %p117, %p118
    %p120 = scmp.ne.s32.totalorder %s109, %s112
    %p121 = scmp.eq.s32.totalorder %s15, 3
    %p122 = por %p120, %p121
    %p123 = scmp.ne.s32.totalorder %s112, %s113
    %p124 = scmp.eq.s32.totalorder %s15, 0
    %p125 = por %p123, %p124
    %p126 = scmp.ne.s32.totalorder %s112, %s113
    %p127 = scmp.eq.s32.totalorder %s16, 3
    %p128 = por %p126, %p127
    %p130 = scmp.ne.s32.totalorder %s113, %s129
    %p131 = scmp.eq.s32.totalorder %s16, 0
    %p132 = por %p130, %p131
    %p133 = scmp.le.s32.totalorder 1, %s10
    %p134 = scmp.lt.s32.totalorder %s10, 5
    %p135 = pnand %p133, %p134
    %p136 = pneg %p135
    // Predicated region
    $region9: #{tpu_custom_call.1} parent=5 // pred_check
      _
    $region10: #{tpu_custom_call.1} parent=5 // pred_check_branch
      %138 = sbr.rel (%p135) target = $region12
    $region11: #{tpu_custom_call.1} parent=5 // pred_region
      %s139 = ssub.s32 %s10, 1
      // Predicated region
      $region13: #{tpu_custom_call.1} parent=11 // pred_check
        %p140 = pneg %p57
      $region14: #{tpu_custom_call.1} parent=11 // pred_check_branch
        %142 = sbr.rel (%p140) target = $region16
      $region15: #{tpu_custom_call.1} parent=11 // pred_region
        _
      $region16: #{tpu_custom_call.1} parent=11 // pred_fallthru
        _
      // Predicated region
      $region17: #{tpu_custom_call.1} parent=11 // pred_check
        %p143 = pneg %p78
      $region18: #{tpu_custom_call.1} parent=11 // pred_check_branch
        %145 = sbr.rel (%p143) target = $region20
      $region19: #{tpu_custom_call.1} parent=11 // pred_region
        _
      $region20: #{tpu_custom_call.1} parent=11 // pred_fallthru
        _
      // Predicated region
      $region21: #{tpu_custom_call.1} parent=11 // pred_check
        %p146 = pneg %p99
      $region22: #{tpu_custom_call.1} parent=11 // pred_check_branch
        %148 = sbr.rel (%p146) target = $region24
      $region23: #{tpu_custom_call.1} parent=11 // pred_region
        _
      $region24: #{tpu_custom_call.1} parent=11 // pred_fallthru
        _
    $region12: #{tpu_custom_call.1} parent=5 // pred_fallthru
      _
    %p149 = scmp.lt.s32.totalorder %s10, 4
    // Predicated region
    $region25: #{tpu_custom_call.1} parent=5 // pred_check
      %p150 = pneg %p149
    $region26: #{tpu_custom_call.1} parent=5 // pred_check_branch
      %152 = sbr.rel (%p150) target = $region28
    $region27: #{tpu_custom_call.1} parent=5 // pred_region
      // Predicated region
      $region29: #{tpu_custom_call.1} parent=27 // pred_check
        %p153 = pneg %p30
      $region30: #{tpu_custom_call.1} parent=27 // pred_check_branch
        %155 = sbr.rel (%p153) target = $region32
      $region31: #{tpu_custom_call.1} parent=27 // pred_region
        %s156 = smul.u32 4, %s10
        %p157 = scmp.lt.s32.totalorder %s156, 15
        %s158 = scalar_select %p157, %s156, 15
        %s159 = smul.addr %s158, 4
        %s160 = scalar_lea.vmem %s0, %s159
        %s161 = smul.u32 4, %s10
      $region32: #{tpu_custom_call.1} parent=27 // pred_fallthru
        _
    $region28: #{tpu_custom_call.1} parent=5 // pred_fallthru
      _
    %p162 = scmp.le.s32.totalorder 1, %s10
    %p163 = scmp.lt.s32.totalorder %s10, 5
    %p164 = pnand %p162, %p163
    %p165 = pneg %p164
    // Predicated region
    $region33: #{tpu_custom_call.1} parent=5 // pred_check
      _
    $region34: #{tpu_custom_call.1} parent=5 // pred_check_branch
      %167 = sbr.rel (%p164) target = $region36
    $region35: #{tpu_custom_call.1} parent=5 // pred_region
      %s168 = ssub.s32 %s10, 1
      %s169 = smul.u32 4, %s15
      %p170 = scmp.lt.s32.totalorder %s169, 15
      %s171 = scalar_select %p170, %s169, 15
      %s172 = smul.addr %s171, 4
      %s173 = scalar_lea.vmem %s0, %s172
      %p174 = pneg %p36
      %p175 = pneg %p33
      %p176 = pneg %p57
      %p177 = pneg %p54
      %p178 = pneg %p78
      %p179 = pneg %p75
      %p180 = pneg %p99
      %p181 = pneg %p96
      %p182 = pneg %p125
      %p183 = pneg %p122
      %s184 = smul.u32 4, %s15
      %p185 = scmp.lt.s32.totalorder %s184, 15
      %s186 = scalar_select %p185, %s184, 15
      %s187 = smul.addr %s186, 8
      %s188 = scalar_lea.vmem %s4, %s187
      %s189 = smul.u32 4, %s15
      %p190 = scmp.lt.s32.totalorder %s189, 15
      %s191 = scalar_select %p190, %s189, 15
      %s192 = smul.addr %s191, 4
      %s193 = scalar_lea.vmem %s0, %s192
      %s194 = smul.u32 4, %s15
      %s195 = smul.u32 4, %s15
      %p196 = scmp.lt.s32.totalorder %s195, 15
      %s197 = scalar_select %p196, %s195, 15
      %s198 = smul.addr %s197, 8
      %s199 = scalar_lea.vmem %s4, %s198
      %s200 = smul.u32 4, %s15
      %v202 = vld [vmem:[%s193] sm:$0xf]
      %v203 = vld [vmem:[%s193 + $0x4] sm:$0xf]
      %v204 = vld [vmem:[%s193 + $0x8] sm:$0xf]
      %v205 = vld [vmem:[%s193 + $0xc] sm:$0xf]
      %v206 = vld [vmem:[%s1] sm:$0xff]
      %v207 = vld [vmem:[%s1 + $0x8] sm:$0xff]
      %v208 = vld [vmem:[%s1 + $0x10] sm:$0xf]
      %v209 = vld [vmem:[%s1 + $0x14] sm:$0xff]
      %v210 = vld [vmem:[%s1 + $0x1c] sm:$0xff]
      %v211 = vld [vmem:[%s1 + $0x24] sm:$0xf]
      %v212 = vld [vmem:[%s2] sm:$0x1f]
      %v214 = vlaneseq
      %v215 = vshrl.u32 %v214, 7
      %v216 = vsub.s32 0, %v215
      %v217 = vrot.slane %v212, %v216
      %v218 = vlaneseq
      %v219 = vshrl.u32 %v218, 7
      %v220 = vsub.s32 1, %v219
      %v221 = vrot.slane %v212, %v220
      %v222 = vlaneseq
      %v223 = vshrl.u32 %v222, 7
      %v224 = vsub.s32 2, %v223
      %v225 = vrot.slane %v212, %v224
      %v226 = vlaneseq
      %v227 = vshrl.u32 %v226, 7
      %v228 = vsub.s32 3, %v227
      %v229 = vrot.slane %v212, %v228
      %v230 = vlaneseq
      %v231 = vshrl.u32 %v230, 7
      %v232 = vsub.s32 4, %v231
      %v233 = vrot.slane %v212, %v232
      %v243 = vunpack.c.l.b16 %v202
      %v244 = vunpack.c.l.b16 %v203
      %v245 = vunpack.c.l.b16 %v204
      %v246 = vunpack.c.l.b16 %v205
      %v247 = vpack.c.b16 %v244, %v243
      %v248 = vpack.c.b16 %v246, %v245
      %v255 = vunpack.c.l.b16 %v206
      %v256 = vunpack.c.h.b16 %v206
      %v257 = vunpack.c.l.b16 %v207
      %v258 = vunpack.c.h.b16 %v207
      %v259 = vunpack.c.l.b16 %v208
      %v260 = vunpack.c.l.b16 %v209
      %v261 = vunpack.c.h.b16 %v209
      %v262 = vunpack.c.l.b16 %v210
      %v263 = vunpack.c.h.b16 %v210
      %v264 = vunpack.c.l.b16 %v211
      %v265 = vpack.c.b16 %v260, %v255
      %v266 = vpack.c.b16 %v261, %v256
      %v267 = vpack.c.b16 %v262, %v257
      %v268 = vpack.c.b16 %v263, %v258
      %v269 = vpack.c.b16 %v264, %v259
      %vm275 = vcmask 130048
      %v277 = vsel %vm275, %v247, 0
      %v280 = vsel %vm275, %v248, 0
      %282 = vmatprep.subr.bf16.mxu0 %v266
      %283 = vmatpush1.bf16.msra.mxu0 %v265
      %284 = vmatprep.subr.bf16.mxu0 0
      %285 = vmatpush1.bf16.msra.mxu0 0
      %286 = vmatprep.subr.bf16.mxu0 0
      %287 = vmatpush1.bf16.msra.mxu0 0
      %288 = vmatprep.subr.bf16.mxu0 0
      %289 = vmatpush1.bf16.msra.mxu0 0
      %290 = vmatprep.subr.bf16.mxu0 0
      %291 = vmatpush1.bf16.msra.mxu0 0
      %292 = vmatprep.subr.bf16.mxu0 0
      %293 = vmatpush1.bf16.msra.mxu0 0
      %294 = vmatprep.subr.bf16.mxu0 0
      %295 = vmatpush1.bf16.msra.mxu0 0
      %296 = vmatprep.subr.bf16.mxu0 0
      %297 = vmatpush1.bf16.msra.mxu0 0
      %298 = vmatprep.subr.bf16.mxu0 0
      %299 = vmatpush1.bf16.msra.mxu0 0
      %300 = vmatprep.subr.bf16.mxu0 0
      %301 = vmatpush1.bf16.msra.mxu0 0
      %302 = vmatprep.subr.bf16.mxu0 0
      %303 = vmatpush1.bf16.msra.mxu0 0
      %304 = vmatprep.subr.bf16.mxu0 0
      %305 = vmatpush1.bf16.msra.mxu0 0
      %306 = vmatprep.subr.bf16.mxu0 0
      %307 = vmatpush1.bf16.msra.mxu0 0
      %308 = vmatprep.subr.bf16.mxu0 0
      %309 = vmatpush1.bf16.msra.mxu0 0
      %310 = vmatprep.subr.bf16.mxu0 0
      %311 = vmatpush1.bf16.msra.mxu0 0
      %312 = vmatprep.subr.bf16.mxu0 0
      %313 = vmatpush1.bf16.msra.mxu0 0
      %314 = vmatprep.mubr.bf16.mxu0 0
      %315 = vmatmul.mubr.bf16.gmra.mrb[0].mxu0 %v277
      %v316 = vpop.f32.mrb[0].mxu0
      %v317 = vadd.f32 %v217, %v316
      %v318 = vpop.f32.mrb[0].mxu0
      %v319 = vadd.f32 %v221, %v318
      %v320 = vpop.f32.mrb[0].mxu0
      %v321 = vadd.f32 %v217, %v320
      %v322 = vpop.f32.mrb[0].mxu0
      %v323 = vadd.f32 %v221, %v322
      %324 = vmatprep.mubr.bf16.mxu0 0
      %325 = vmatmul.mubr.bf16.gmra.mrb[0].mxu0 %v280
      %v326 = vpop.f32.mrb[0].mxu0
      %v327 = vadd.f32 %v217, %v326
      %v328 = vpop.f32.mrb[0].mxu0
      %v329 = vadd.f32 %v221, %v328
      %v330 = vpop.f32.mrb[0].mxu0
      %v331 = vadd.f32 %v217, %v330
      %v332 = vpop.f32.mrb[0].mxu0
      %v333 = vadd.f32 %v221, %v332
      %334 = vdwg.mxu0
      %335 = vmatprep.subr.bf16.mxu0 %v268
      %336 = vmatpush1.bf16.msra.mxu0 %v267
      %337 = vmatprep.subr.bf16.mxu0 0
      %338 = vmatpush1.bf16.msra.mxu0 0
      %339 = vmatprep.subr.bf16.mxu0 0
      %340 = vmatpush1.bf16.msra.mxu0 0
      %341 = vmatprep.subr.bf16.mxu0 0
      %342 = vmatpush1.bf16.msra.mxu0 0
      %343 = vmatprep.subr.bf16.mxu0 0
      %344 = vmatpush1.bf16.msra.mxu0 0
      %345 = vmatprep.subr.bf16.mxu0 0
      %346 = vmatpush1.bf16.msra.mxu0 0
      %347 = vmatprep.subr.bf16.mxu0 0
      %348 = vmatpush1.bf16.msra.mxu0 0
      %349 = vmatprep.subr.bf16.mxu0 0
      %350 = vmatpush1.bf16.msra.mxu0 0
      %351 = vmatprep.subr.bf16.mxu0 0
      %352 = vmatpush1.bf16.msra.mxu0 0
      %353 = vmatprep.subr.bf16.mxu0 0
      %354 = vmatpush1.bf16.msra.mxu0 0
      %355 = vmatprep.subr.bf16.mxu0 0
      %356 = vmatpush1.bf16.msra.mxu0 0
      %357 = vmatprep.subr.bf16.mxu0 0
      %358 = vmatpush1.bf16.msra.mxu0 0
      %359 = vmatprep.subr.bf16.mxu0 0
      %360 = vmatpush1.bf16.msra.mxu0 0
      %361 = vmatprep.subr.bf16.mxu0 0
      %362 = vmatpush1.bf16.msra.mxu0 0
      %363 = vmatprep.subr.bf16.mxu0 0
      %364 = vmatpush1.bf16.msra.mxu0 0
      %365 = vmatprep.subr.bf16.mxu0 0
      %366 = vmatpush1.bf16.msra.mxu0 0
      %367 = vmatprep.mubr.bf16.mxu0 0
      %368 = vmatmul.mubr.bf16.gmra.mrb[0].mxu0 %v277
      %v369 = vpop.f32.mrb[0].mxu0
      %v370 = vadd.f32 %v225, %v369
      %v371 = vpop.f32.mrb[0].mxu0
      %v372 = vadd.f32 %v229, %v371
      %v373 = vpop.f32.mrb[0].mxu0
      %v374 = vadd.f32 %v225, %v373
      %v375 = vpop.f32.mrb[0].mxu0
      %v376 = vadd.f32 %v229, %v375
      %377 = vmatprep.mubr.bf16.mxu0 0
      %378 = vmatmul.mubr.bf16.gmra.mrb[0].mxu0 %v280
      %v379 = vpop.f32.mrb[0].mxu0
      %v380 = vadd.f32 %v225, %v379
      %v381 = vpop.f32.mrb[0].mxu0
      %v382 = vadd.f32 %v229, %v381
      %v383 = vpop.f32.mrb[0].mxu0
      %v384 = vadd.f32 %v225, %v383
      %v385 = vpop.f32.mrb[0].mxu0
      %v386 = vadd.f32 %v229, %v385
      %387 = vdwg.mxu0
      %388 = vmatprep.subr.bf16.mxu0 0
      %389 = vmatpush1.bf16.msra.mxu0 %v269
      %390 = vmatprep.subr.bf16.mxu0 0
      %391 = vmatpush1.bf16.msra.mxu0 0
      %392 = vmatprep.subr.bf16.mxu0 0
      %393 = vmatpush1.bf16.msra.mxu0 0
      %394 = vmatprep.subr.bf16.mxu0 0
      %395 = vmatpush1.bf16.msra.mxu0 0
      %396 = vmatprep.subr.bf16.mxu0 0
      %397 = vmatpush1.bf16.msra.mxu0 0
      %398 = vmatprep.subr.bf16.mxu0 0
      %399 = vmatpush1.bf16.msra.mxu0 0
      %400 = vmatprep.subr.bf16.mxu0 0
      %401 = vmatpush1.bf16.msra.mxu0 0
      %402 = vmatprep.subr.bf16.mxu0 0
      %403 = vmatpush1.bf16.msra.mxu0 0
      %404 = vmatprep.subr.bf16.mxu0 0
      %405 = vmatpush1.bf16.msra.mxu0 0
      %406 = vmatprep.subr.bf16.mxu0 0
      %407 = vmatpush1.bf16.msra.mxu0 0
      %408 = vmatprep.subr.bf16.mxu0 0
      %409 = vmatpush1.bf16.msra.mxu0 0
      %410 = vmatprep.subr.bf16.mxu0 0
      %411 = vmatpush1.bf16.msra.mxu0 0
      %412 = vmatprep.subr.bf16.mxu0 0
      %413 = vmatpush1.bf16.msra.mxu0 0
      %414 = vmatprep.subr.bf16.mxu0 0
      %415 = vmatpush1.bf16.msra.mxu0 0
      %416 = vmatprep.subr.bf16.mxu0 0
      %417 = vmatpush1.bf16.msra.mxu0 0
      %418 = vmatprep.subr.bf16.mxu0 0
      %419 = vmatpush1.bf16.msra.mxu0 0
      %420 = vmatprep.mubr.bf16.mxu0 0
      %421 = vmatmul.mubr.bf16.gmra.mrb[0].mxu0 %v277
      %v422 = vpop.f32.mrb[0].mxu0
      %v423 = vadd.f32 %v233, %v422
      %v424 = vpop.f32.mrb[0].mxu0
      %v425 = vpop.f32.mrb[0].mxu0
      %v426 = vadd.f32 %v233, %v425
      %v427 = vpop.f32.mrb[0].mxu0
      %428 = vmatprep.mubr.bf16.mxu0 0
      %429 = vmatmul.mubr.bf16.gmra.mrb[0].mxu0 %v280
      %v430 = vpop.f32.mrb[0].mxu0
      %v431 = vadd.f32 %v233, %v430
      %v432 = vpop.f32.mrb[0].mxu0
      %v433 = vpop.f32.mrb[0].mxu0
      %v434 = vadd.f32 %v233, %v433
      %v435 = vpop.f32.mrb[0].mxu0
      %436 = vdwg.mxu0
      %v437 = vld [vmem:[%s3] sm:$0xf]
      %v438 = vld [vmem:[%s3 + $0x4] sm:$0xf]
      %v439 = vpack.c.bf16 %v323, %v319
      %v442 = vunpack.c.l.b16 %v437
      %v443 = vunpack.c.l.b16 %v438
      %v444 = vpack.c.b16 %v443, %v442
      %v446 = vsel %vm275, %v444, 0
      %448 = vmatprep.subr.bf16.mxu0 0
      %449 = vmatpush1.bf16.msra.mxu0 %v439
      %450 = vmatprep.subr.bf16.mxu0 0
      %451 = vmatpush1.bf16.msra.mxu0 0
      %452 = vmatprep.subr.bf16.mxu0 0
      %453 = vmatpush1.bf16.msra.mxu0 0
      %454 = vmatprep.subr.bf16.mxu0 0
      %455 = vmatpush1.bf16.msra.mxu0 0
      %456 = vmatprep.subr.bf16.mxu0 0
      %457 = vmatpush1.bf16.msra.mxu0 0
      %458 = vmatprep.subr.bf16.mxu0 0
      %459 = vmatpush1.bf16.msra.mxu0 0
      %460 = vmatprep.subr.bf16.mxu0 0
      %461 = vmatpush1.bf16.msra.mxu0 0
      %462 = vmatprep.subr.bf16.mxu0 0
      %463 = vmatpush1.bf16.msra.mxu0 0
      %464 = vmatprep.subr.bf16.mxu0 0
      %465 = vmatpush1.bf16.msra.mxu0 0
      %466 = vmatprep.subr.bf16.mxu0 0
      %467 = vmatpush1.bf16.msra.mxu0 0
      %468 = vmatprep.subr.bf16.mxu0 0
      %469 = vmatpush1.bf16.msra.mxu0 0
      %470 = vmatprep.subr.bf16.mxu0 0
      %471 = vmatpush1.bf16.msra.mxu0 0
      %472 = vmatprep.subr.bf16.mxu0 0
      %473 = vmatpush1.bf16.msra.mxu0 0
      %474 = vmatprep.subr.bf16.mxu0 0
      %475 = vmatpush1.bf16.msra.mxu0 0
      %476 = vmatprep.subr.bf16.mxu0 0
      %477 = vmatpush1.bf16.msra.mxu0 0
      %478 = vmatprep.subr.bf16.mxu0 0
      %479 = vmatpush1.bf16.msra.mxu0 0
      %480 = vmatprep.mubr.bf16.mxu0 0
      %481 = vmatmul.mubr.bf16.gmra.mrb[0].mxu0 %v446
      %v482 = vpop.f32.mrb[0].mxu0
      %v483 = vadd.f32 0.0, %v482
      %v484 = vpop.f32.mrb[0].mxu0
      %v485 = vpop.f32.mrb[0].mxu0
      %v486 = vadd.f32 0.0, %v485
      %v487 = vpop.f32.mrb[0].mxu0
      %488 = vdwg.mxu0
      %v489 = vadd.f32 %v317, %v483
      %v490 = vadd.f32 %v321, %v486
      %s491 = scalar_lea.vmem %s3, 8
      %v492 = vld [vmem:[%s491] sm:$0xf]
      %v493 = vld [vmem:[%s491 + $0x4] sm:$0xf]
      %v494 = vpack.c.bf16 %v374, %v370
      %v497 = vunpack.c.l.b16 %v492
      %v498 = vunpack.c.l.b16 %v493
      %v499 = vpack.c.b16 %v498, %v497
      %v501 = vsel %vm275, %v499, 0
      %503 = vmatprep.subr.bf16.mxu0 0
      %504 = vmatpush1.bf16.msra.mxu0 %v494
      %505 = vmatprep.subr.bf16.mxu0 0
      %506 = vmatpush1.bf16.msra.mxu0 0
      %507 = vmatprep.subr.bf16.mxu0 0
      %508 = vmatpush1.bf16.msra.mxu0 0
      %509 = vmatprep.subr.bf16.mxu0 0
      %510 = vmatpush1.bf16.msra.mxu0 0
      %511 = vmatprep.subr.bf16.mxu0 0
      %512 = vmatpush1.bf16.msra.mxu0 0
      %513 = vmatprep.subr.bf16.mxu0 0
      %514 = vmatpush1.bf16.msra.mxu0 0
      %515 = vmatprep.subr.bf16.mxu0 0
      %516 = vmatpush1.bf16.msra.mxu0 0
      %517 = vmatprep.subr.bf16.mxu0 0
      %518 = vmatpush1.bf16.msra.mxu0 0
      %519 = vmatprep.subr.bf16.mxu0 0
      %520 = vmatpush1.bf16.msra.mxu0 0
      %521 = vmatprep.subr.bf16.mxu0 0
      %522 = vmatpush1.bf16.msra.mxu0 0
      %523 = vmatprep.subr.bf16.mxu0 0
      %524 = vmatpush1.bf16.msra.mxu0 0
      %525 = vmatprep.subr.bf16.mxu0 0
      %526 = vmatpush1.bf16.msra.mxu0 0
      %527 = vmatprep.subr.bf16.mxu0 0
      %528 = vmatpush1.bf16.msra.mxu0 0
      %529 = vmatprep.subr.bf16.mxu0 0
      %530 = vmatpush1.bf16.msra.mxu0 0
      %531 = vmatprep.subr.bf16.mxu0 0
      %532 = vmatpush1.bf16.msra.mxu0 0
      %533 = vmatprep.subr.bf16.mxu0 0
      %534 = vmatpush1.bf16.msra.mxu0 0
      %535 = vmatprep.mubr.bf16.mxu0 0
      %536 = vmatmul.mubr.bf16.gmra.mrb[0].mxu0 %v501
      %v537 = vpop.f32.mrb[0].mxu0
      %v538 = vadd.f32 0.0, %v537
      %v539 = vpop.f32.mrb[0].mxu0
      %v540 = vpop.f32.mrb[0].mxu0
      %v541 = vadd.f32 0.0, %v540
      %v542 = vpop.f32.mrb[0].mxu0
      %543 = vdwg.mxu0
      %v544 = vadd.f32 %v489, %v538
      %v545 = vadd.f32 %v490, %v541
      %s546 = scalar_lea.vmem %s3, 16
      %v547 = vld [vmem:[%s546] sm:$0xf]
      %v548 = vld [vmem:[%s546 + $0x4] sm:$0xf]
      %v549 = vpack.c.bf16 %v376, %v372
      %v552 = vunpack.c.l.b16 %v547
      %v553 = vunpack.c.l.b16 %v548
      %v554 = vpack.c.b16 %v553, %v552
      %v556 = vsel %vm275, %v554, 0
      %558 = vmatprep.subr.bf16.mxu0 0
      %559 = vmatpush1.bf16.msra.mxu0 %v549
      %560 = vmatprep.subr.bf16.mxu0 0
      %561 = vmatpush1.bf16.msra.mxu0 0
      %562 = vmatprep.subr.bf16.mxu0 0
      %563 = vmatpush1.bf16.msra.mxu0 0
      %564 = vmatprep.subr.bf16.mxu0 0
      %565 = vmatpush1.bf16.msra.mxu0 0
      %566 = vmatprep.subr.bf16.mxu0 0
      %567 = vmatpush1.bf16.msra.mxu0 0
      %568 = vmatprep.subr.bf16.mxu0 0
      %569 = vmatpush1.bf16.msra.mxu0 0
      %570 = vmatprep.subr.bf16.mxu0 0
      %571 = vmatpush1.bf16.msra.mxu0 0
      %572 = vmatprep.subr.bf16.mxu0 0
      %573 = vmatpush1.bf16.msra.mxu0 0
      %574 = vmatprep.subr.bf16.mxu0 0
      %575 = vmatpush1.bf16.msra.mxu0 0
      %576 = vmatprep.subr.bf16.mxu0 0
      %577 = vmatpush1.bf16.msra.mxu0 0
      %578 = vmatprep.subr.bf16.mxu0 0
      %579 = vmatpush1.bf16.msra.mxu0 0
      %580 = vmatprep.subr.bf16.mxu0 0
      %581 = vmatpush1.bf16.msra.mxu0 0
      %582 = vmatprep.subr.bf16.mxu0 0
      %583 = vmatpush1.bf16.msra.mxu0 0
      %584 = vmatprep.subr.bf16.mxu0 0
      %585 = vmatpush1.bf16.msra.mxu0 0
      %586 = vmatprep.subr.bf16.mxu0 0
      %587 = vmatpush1.bf16.msra.mxu0 0
      %588 = vmatprep.subr.bf16.mxu0 0
      %589 = vmatpush1.bf16.msra.mxu0 0
      %590 = vmatprep.mubr.bf16.mxu0 0
      %591 = vmatmul.mubr.bf16.gmra.mrb[0].mxu0 %v556
      %v592 = vpop.f32.mrb[0].mxu0
      %v593 = vadd.f32 0.0, %v592
      %v594 = vpop.f32.mrb[0].mxu0
      %v595 = vpop.f32.mrb[0].mxu0
      %v596 = vadd.f32 0.0, %v595
      %v597 = vpop.f32.mrb[0].mxu0
      %598 = vdwg.mxu0
      %v599 = vadd.f32 %v544, %v593
      %v600 = vadd.f32 %v545, %v596
      %s601 = scalar_lea.vmem %s3, 24
      %v602 = vld [vmem:[%s601] sm:$0xf]
      %v603 = vld [vmem:[%s601 + $0x4] sm:$0xf]
      %v604 = vpack.c.bf16 %v426, %v423
      %v607 = vunpack.c.l.b16 %v602
      %v608 = vunpack.c.l.b16 %v603
      %v609 = vpack.c.b16 %v608, %v607
      %v611 = vsel %vm275, %v609, 0
      %613 = vmatprep.subr.bf16.mxu0 0
      %614 = vmatpush1.bf16.msra.mxu0 %v604
      %615 = vmatprep.subr.bf16.mxu0 0
      %616 = vmatpush1.bf16.msra.mxu0 0
      %617 = vmatprep.subr.bf16.mxu0 0
      %618 = vmatpush1.bf16.msra.mxu0 0
      %619 = vmatprep.subr.bf16.mxu0 0
      %620 = vmatpush1.bf16.msra.mxu0 0
      %621 = vmatprep.subr.bf16.mxu0 0
      %622 = vmatpush1.bf16.msra.mxu0 0
      %623 = vmatprep.subr.bf16.mxu0 0
      %624 = vmatpush1.bf16.msra.mxu0 0
      %625 = vmatprep.subr.bf16.mxu0 0
      %626 = vmatpush1.bf16.msra.mxu0 0
      %627 = vmatprep.subr.bf16.mxu0 0
      %628 = vmatpush1.bf16.msra.mxu0 0
      %629 = vmatprep.subr.bf16.mxu0 0
      %630 = vmatpush1.bf16.msra.mxu0 0
      %631 = vmatprep.subr.bf16.mxu0 0
      %632 = vmatpush1.bf16.msra.mxu0 0
      %633 = vmatprep.subr.bf16.mxu0 0
      %634 = vmatpush1.bf16.msra.mxu0 0
      %635 = vmatprep.subr.bf16.mxu0 0
      %636 = vmatpush1.bf16.msra.mxu0 0
      %637 = vmatprep.subr.bf16.mxu0 0
      %638 = vmatpush1.bf16.msra.mxu0 0
      %639 = vmatprep.subr.bf16.mxu0 0
      %640 = vmatpush1.bf16.msra.mxu0 0
      %641 = vmatprep.subr.bf16.mxu0 0
      %642 = vmatpush1.bf16.msra.mxu0 0
      %643 = vmatprep.subr.bf16.mxu0 0
      %644 = vmatpush1.bf16.msra.mxu0 0
      %645 = vmatprep.mubr.bf16.mxu0 0
      %646 = vmatmul.mubr.bf16.gmra.mrb[0].mxu0 %v611
      %v647 = vpop.f32.mrb[0].mxu0
      %v648 = vadd.f32 0.0, %v647
      %v649 = vpop.f32.mrb[0].mxu0
      %v650 = vpop.f32.mrb[0].mxu0
      %v651 = vadd.f32 0.0, %v650
      %v652 = vpop.f32.mrb[0].mxu0
      %653 = vdwg.mxu0
      %v654 = vadd.f32 %v599, %v648
      %v655 = vadd.f32 %v600, %v651
      %vm656 = vcmask 261120
      %657 = vst.msk [vmem:[%s199] sm:$0xff] %vm656, %v654
      %658 = vst.msk [vmem:[%s199 + $0x8] sm:$0xff] %vm656, %v655
      %v659 = vld [vmem:[%s3] sm:$0xf]
      %v660 = vld [vmem:[%s3 + $0x4] sm:$0xf]
      %v661 = vpack.c.bf16 %v333, %v329
      %v664 = vunpack.c.l.b16 %v659
      %v665 = vunpack.c.l.b16 %v660
      %v666 = vpack.c.b16 %v665, %v664
      %v668 = vsel %vm275, %v666, 0
      %670 = vmatprep.subr.bf16.mxu0 0
      %671 = vmatpush1.bf16.msra.mxu0 %v661
      %672 = vmatprep.subr.bf16.mxu0 0
      %673 = vmatpush1.bf16.msra.mxu0 0
      %674 = vmatprep.subr.bf16.mxu0 0
      %675 = vmatpush1.bf16.msra.mxu0 0
      %676 = vmatprep.subr.bf16.mxu0 0
      %677 = vmatpush1.bf16.msra.mxu0 0
      %678 = vmatprep.subr.bf16.mxu0 0
      %679 = vmatpush1.bf16.msra.mxu0 0
      %680 = vmatprep.subr.bf16.mxu0 0
      %681 = vmatpush1.bf16.msra.mxu0 0
      %682 = vmatprep.subr.bf16.mxu0 0
      %683 = vmatpush1.bf16.msra.mxu0 0
      %684 = vmatprep.subr.bf16.mxu0 0
      %685 = vmatpush1.bf16.msra.mxu0 0
      %686 = vmatprep.subr.bf16.mxu0 0
      %687 = vmatpush1.bf16.msra.mxu0 0
      %688 = vmatprep.subr.bf16.mxu0 0
      %689 = vmatpush1.bf16.msra.mxu0 0
      %690 = vmatprep.subr.bf16.mxu0 0
      %691 = vmatpush1.bf16.msra.mxu0 0
      %692 = vmatprep.subr.bf16.mxu0 0
      %693 = vmatpush1.bf16.msra.mxu0 0
      %694 = vmatprep.subr.bf16.mxu0 0
      %695 = vmatpush1.bf16.msra.mxu0 0
      %696 = vmatprep.subr.bf16.mxu0 0
      %697 = vmatpush1.bf16.msra.mxu0 0
      %698 = vmatprep.subr.bf16.mxu0 0
      %699 = vmatpush1.bf16.msra.mxu0 0
      %700 = vmatprep.subr.bf16.mxu0 0
      %701 = vmatpush1.bf16.msra.mxu0 0
      %702 = vmatprep.mubr.bf16.mxu0 0
      %703 = vmatmul.mubr.bf16.gmra.mrb[0].mxu0 %v668
      %v704 = vpop.f32.mrb[0].mxu0
      %v705 = vadd.f32 0.0, %v704
      %v706 = vpop.f32.mrb[0].mxu0
      %v707 = vpop.f32.mrb[0].mxu0
      %v708 = vadd.f32 0.0, %v707
      %v709 = vpop.f32.mrb[0].mxu0
      %710 = vdwg.mxu0
      %v711 = vadd.f32 %v327, %v705
      %v712 = vadd.f32 %v331, %v708
      %v713 = vld [vmem:[%s491] sm:$0xf]
      %v714 = vld [vmem:[%s491 + $0x4] sm:$0xf]
      %v715 = vpack.c.bf16 %v384, %v380
      %v718 = vunpack.c.l.b16 %v713
      %v719 = vunpack.c.l.b16 %v714
      %v720 = vpack.c.b16 %v719, %v718
      %v722 = vsel %vm275, %v720, 0
      %724 = vmatprep.subr.bf16.mxu0 0
      %725 = vmatpush1.bf16.msra.mxu0 %v715
      %726 = vmatprep.subr.bf16.mxu0 0
      %727 = vmatpush1.bf16.msra.mxu0 0
      %728 = vmatprep.subr.bf16.mxu0 0
      %729 = vmatpush1.bf16.msra.mxu0 0
      %730 = vmatprep.subr.bf16.mxu0 0
      %731 = vmatpush1.bf16.msra.mxu0 0
      %732 = vmatprep.subr.bf16.mxu0 0
      %733 = vmatpush1.bf16.msra.mxu0 0
      %734 = vmatprep.subr.bf16.mxu0 0
      %735 = vmatpush1.bf16.msra.mxu0 0
      %736 = vmatprep.subr.bf16.mxu0 0
      %737 = vmatpush1.bf16.msra.mxu0 0
      %738 = vmatprep.subr.bf16.mxu0 0
      %739 = vmatpush1.bf16.msra.mxu0 0
      %740 = vmatprep.subr.bf16.mxu0 0
      %741 = vmatpush1.bf16.msra.mxu0 0
      %742 = vmatprep.subr.bf16.mxu0 0
      %743 = vmatpush1.bf16.msra.mxu0 0
      %744 = vmatprep.subr.bf16.mxu0 0
      %745 = vmatpush1.bf16.msra.mxu0 0
      %746 = vmatprep.subr.bf16.mxu0 0
      %747 = vmatpush1.bf16.msra.mxu0 0
      %748 = vmatprep.subr.bf16.mxu0 0
      %749 = vmatpush1.bf16.msra.mxu0 0
      %750 = vmatprep.subr.bf16.mxu0 0
      %751 = vmatpush1.bf16.msra.mxu0 0
      %752 = vmatprep.subr.bf16.mxu0 0
      %753 = vmatpush1.bf16.msra.mxu0 0
      %754 = vmatprep.subr.bf16.mxu0 0
      %755 = vmatpush1.bf16.msra.mxu0 0
      %756 = vmatprep.mubr.bf16.mxu0 0
      %757 = vmatmul.mubr.bf16.gmra.mrb[0].mxu0 %v722
      %v758 = vpop.f32.mrb[0].mxu0
      %v759 = vadd.f32 0.0, %v758
      %v760 = vpop.f32.mrb[0].mxu0
      %v761 = vpop.f32.mrb[0].mxu0
      %v762 = vadd.f32 0.0, %v761
      %v763 = vpop.f32.mrb[0].mxu0
      %764 = vdwg.mxu0
      %v765 = vadd.f32 %v711, %v759
      %v766 = vadd.f32 %v712, %v762
      %v767 = vld [vmem:[%s546] sm:$0xf]
      %v768 = vld [vmem:[%s546 + $0x4] sm:$0xf]
      %v769 = vpack.c.bf16 %v386, %v382
      %v772 = vunpack.c.l.b16 %v767
      %v773 = vunpack.c.l.b16 %v768
      %v774 = vpack.c.b16 %v773, %v772
      %v776 = vsel %vm275, %v774, 0
      %778 = vmatprep.subr.bf16.mxu0 0
      %779 = vmatpush1.bf16.msra.mxu0 %v769
      %780 = vmatprep.subr.bf16.mxu0 0
      %781 = vmatpush1.bf16.msra.mxu0 0
      %782 = vmatprep.subr.bf16.mxu0 0
      %783 = vmatpush1.bf16.msra.mxu0 0
      %784 = vmatprep.subr.bf16.mxu0 0
      %785 = vmatpush1.bf16.msra.mxu0 0
      %786 = vmatprep.subr.bf16.mxu0 0
      %787 = vmatpush1.bf16.msra.mxu0 0
      %788 = vmatprep.subr.bf16.mxu0 0
      %789 = vmatpush1.bf16.msra.mxu0 0
      %790 = vmatprep.subr.bf16.mxu0 0
      %791 = vmatpush1.bf16.msra.mxu0 0
      %792 = vmatprep.subr.bf16.mxu0 0
      %793 = vmatpush1.bf16.msra.mxu0 0
      %794 = vmatprep.subr.bf16.mxu0 0
      %795 = vmatpush1.bf16.msra.mxu0 0
      %796 = vmatprep.subr.bf16.mxu0 0
      %797 = vmatpush1.bf16.msra.mxu0 0
      %798 = vmatprep.subr.bf16.mxu0 0
      %799 = vmatpush1.bf16.msra.mxu0 0
      %800 = vmatprep.subr.bf16.mxu0 0
      %801 = vmatpush1.bf16.msra.mxu0 0
      %802 = vmatprep.subr.bf16.mxu0 0
      %803 = vmatpush1.bf16.msra.mxu0 0
      %804 = vmatprep.subr.bf16.mxu0 0
      %805 = vmatpush1.bf16.msra.mxu0 0
      %806 = vmatprep.subr.bf16.mxu0 0
      %807 = vmatpush1.bf16.msra.mxu0 0
      %808 = vmatprep.subr.bf16.mxu0 0
      %809 = vmatpush1.bf16.msra.mxu0 0
      %810 = vmatprep.mubr.bf16.mxu0 0
      %811 = vmatmul.mubr.bf16.gmra.mrb[0].mxu0 %v776
      %v812 = vpop.f32.mrb[0].mxu0
      %v813 = vadd.f32 0.0, %v812
      %v814 = vpop.f32.mrb[0].mxu0
      %v815 = vpop.f32.mrb[0].mxu0
      %v816 = vadd.f32 0.0, %v815
      %v817 = vpop.f32.mrb[0].mxu0
      %818 = vdwg.mxu0
      %v819 = vadd.f32 %v765, %v813
      %v820 = vadd.f32 %v766, %v816
      %v821 = vld [vmem:[%s601] sm:$0xf]
      %v822 = vld [vmem:[%s601 + $0x4] sm:$0xf]
      %v823 = vpack.c.bf16 %v434, %v431
      %v826 = vunpack.c.l.b16 %v821
      %v827 = vunpack.c.l.b16 %v822
      %v828 = vpack.c.b16 %v827, %v826
      %v830 = vsel %vm275, %v828, 0
      %832 = vmatprep.subr.bf16.mxu0 0
      %833 = vmatpush1.bf16.msra.mxu0 %v823
      %834 = vmatprep.subr.bf16.mxu0 0
      %835 = vmatpush1.bf16.msra.mxu0 0
      %836 = vmatprep.subr.bf16.mxu0 0
      %837 = vmatpush1.bf16.msra.mxu0 0
      %838 = vmatprep.subr.bf16.mxu0 0
      %839 = vmatpush1.bf16.msra.mxu0 0
      %840 = vmatprep.subr.bf16.mxu0 0
      %841 = vmatpush1.bf16.msra.mxu0 0
      %842 = vmatprep.subr.bf16.mxu0 0
      %843 = vmatpush1.bf16.msra.mxu0 0
      %844 = vmatprep.subr.bf16.mxu0 0
      %845 = vmatpush1.bf16.msra.mxu0 0
      %846 = vmatprep.subr.bf16.mxu0 0
      %847 = vmatpush1.bf16.msra.mxu0 0
      %848 = vmatprep.subr.bf16.mxu0 0
      %849 = vmatpush1.bf16.msra.mxu0 0
      %850 = vmatprep.subr.bf16.mxu0 0
      %851 = vmatpush1.bf16.msra.mxu0 0
      %852 = vmatprep.subr.bf16.mxu0 0
      %853 = vmatpush1.bf16.msra.mxu0 0
      %854 = vmatprep.subr.bf16.mxu0 0
      %855 = vmatpush1.bf16.msra.mxu0 0
      %856 = vmatprep.subr.bf16.mxu0 0
      %857 = vmatpush1.bf16.msra.mxu0 0
      %858 = vmatprep.subr.bf16.mxu0 0
      %859 = vmatpush1.bf16.msra.mxu0 0
      %860 = vmatprep.subr.bf16.mxu0 0
      %861 = vmatpush1.bf16.msra.mxu0 0
      %862 = vmatprep.subr.bf16.mxu0 0
      %863 = vmatpush1.bf16.msra.mxu0 0
      %864 = vmatprep.mubr.bf16.mxu0 0
      %865 = vmatmul.mubr.bf16.gmra.mrb[0].mxu0 %v830
      %v866 = vpop.f32.mrb[0].mxu0
      %v867 = vadd.f32 0.0, %v866
      %v868 = vpop.f32.mrb[0].mxu0
      %v869 = vpop.f32.mrb[0].mxu0
      %v870 = vadd.f32 0.0, %v869
      %v871 = vpop.f32.mrb[0].mxu0
      %872 = vdwg.mxu0
      %v873 = vadd.f32 %v819, %v867
      %v874 = vadd.f32 %v820, %v870
      %875 = vst.msk [vmem:[%s199 + $0x10] sm:$0xff] %vm656, %v873
      %876 = vst.msk [vmem:[%s199 + $0x18] sm:$0xff] %vm656, %v874
      %s877 = smul.u32 4, %s15
      %p878 = scmp.lt.s32.totalorder %s877, 15
      %s879 = scalar_select %p878, %s877, 15
      %s880 = smul.addr %s879, 8
      %s881 = scalar_lea.vmem %s4, %s880
      // Predicated region
      $region37: #{tpu_custom_call.1} parent=35 // pred_check
        %p882 = pneg %p122
      $region38: #{tpu_custom_call.1} parent=35 // pred_check_branch
        %884 = sbr.rel (%p882) target = $region40
      $region39: #{tpu_custom_call.1} parent=35 // pred_region
        %s885 = smul.u32 4, %s15
      $region40: #{tpu_custom_call.1} parent=35 // pred_fallthru
        _
    $region36: #{tpu_custom_call.1} parent=5 // pred_fallthru
      _
    %p886 = scmp.le.s32.totalorder 2, %s10
    // Predicated region
    $region41: #{tpu_custom_call.1} parent=5 // pred_check
      %p887 = pneg %p886
    $region42: #{tpu_custom_call.1} parent=5 // pred_check_branch
      %889 = sbr.rel (%p887) target = $region44
    $region43: #{tpu_custom_call.1} parent=5 // pred_region
      %s890 = ssub.s32 %s10, 2
      // Predicated region
      $region45: #{tpu_custom_call.1} parent=43 // pred_check
        %p891 = pneg %p128
      $region46: #{tpu_custom_call.1} parent=43 // pred_check_branch
        %893 = sbr.rel (%p891) target = $region48
      $region47: #{tpu_custom_call.1} parent=43 // pred_region
        %s894 = smul.u32 4, %s16
        %p895 = scmp.lt.s32.totalorder %s894, 15
        %s896 = scalar_select %p895, %s894, 15
        %s897 = smul.addr %s896, 8
        %s898 = scalar_lea.vmem %s4, %s897
      $region48: #{tpu_custom_call.1} parent=43 // pred_fallthru
        _
    $region44: #{tpu_custom_call.1} parent=5 // pred_fallthru
      _
  $region6: #{tpu_custom_call.1} parent=0 // loop_footer
    %s14 = sadd.s32 1, %s10
  $region7: #{tpu_custom_call.1} parent=0 // loop_footer_branch
    %9 = sbr.rel target = $region3
  $region8: #{tpu_custom_call.1} parent=0 // loop_exit
    _

// kernel: tpu_custom_call.1
$region0: #{tpu_custom_call.1}
  #allocation0 [shape = 'u32[]', space=smem, size = 0x4, offset = 0x4, fixed_abs, tag = 'smem constant byte address 0x4 - core index']
  #allocation1 [shape = 'u32[144,128]{1,0:T(1,128)}', space=vmem, size = 0x12000, scoped, tag = 'internal scratch']
  %s0 = inlined_call_operand.vmem [shape: bf16[128,16], index: 0, kind: input, shape index: {}]
  %s1 = inlined_call_operand.vmem [shape: bf16[16,640], index: 1, kind: input, shape index: {}]
  %s2 = inlined_call_operand.vmem [shape: f32[1,640], index: 2, kind: input, shape index: {}]
  %s3 = inlined_call_operand.vmem [shape: bf16[4,16,16], index: 3, kind: input, shape index: {}]
  %s4 = inlined_call_operand.vmem [shape: f32[128,32], index: 4, kind: output, shape index: {}]
  %s5 = sld [smem:[#allocation0]]
  $region49: #{tpu_custom_call.1} parent=0
    _
  %s7 = ssub.s32 1, %s5
  %s8 = scalar_select 0, %s7, %s5
  loop: start=0, step=1, limit=6
  $region2: #{tpu_custom_call.1} parent=0 // loop_pre_header
    _
  $region3: #{tpu_custom_call.1} parent=0 // loop_header
    %s10 = sphi 0, %s14
    %p11 = scmp.ge.s32.totalorder %s10, 6
    %s20 = sphi 0, %s22
    %s23 = sphi 0, %s20
    %s24 = sphi 0, %s23
    %s40 = sphi 0, %s24
    %s44 = sphi 0, %s44
    %s46 = sphi 0, %s44
    %s47 = sphi 0, %s46
    %s61 = sphi 0, %s47
    %s65 = sphi 0, %s65
    %s67 = sphi 0, %s65
    %s68 = sphi 0, %s67
    %s82 = sphi 0, %s68
    %s86 = sphi 0, %s86
    %s88 = sphi 0, %s86
    %s89 = sphi 0, %s88
    %s103 = sphi 0, %s89
    %s109 = sphi 0, %s111
    %s112 = sphi 0, %s109
    %s113 = sphi 0, %s112
    %s129 = sphi 0, %s113
  $region4: #{tpu_custom_call.1} parent=0 // loop_header_branch
    %13 = sbr.rel (%p11) target = $region8
  $region5: #{tpu_custom_call.1} parent=0 // loop_body
    %s15 = ssub.s32 %s10, 1
    %s16 = ssub.s32 %s10, 2
    %s17 = sadd.s32 %s10, 1
    %s18 = ssub.s32 %s10, %s17
    %p19 = scmp.eq.s32.totalorder %s18, 0
    %s21 = sadd.s32 %s20, 1
    %s22 = scalar_select %p19, %s20, %s21
    %p25 = pneg %p19
    %p26 = scmp.eq.s32.totalorder %s10, 3
    %p27 = por %p25, %p26
    %p28 = scmp.ne.s32.totalorder %s20, %s23
    %p29 = scmp.eq.s32.totalorder %s10, 0
    %p30 = por %p28, %p29
    %p31 = scmp.ne.s32.totalorder %s20, %s23
    %p32 = scmp.eq.s32.totalorder %s15, 3
    %p33 = por %p31, %p32
    %p34 = scmp.ne.s32.totalorder %s23, %s24
    %p35 = scmp.eq.s32.totalorder %s15, 0
    %p36 = por %p34, %p35
    %p37 = scmp.ne.s32.totalorder %s23, %s24
    %p38 = scmp.eq.s32.totalorder %s16, 3
    %p39 = por %p37, %p38
    %p41 = scmp.ne.s32.totalorder %s24, %s40
    %p42 = scmp.eq.s32.totalorder %s16, 0
    %p43 = por %p41, %p42
    %s45 = sadd.s32 %s44, 1
    %p48 = scmp.eq.s32.totalorder %s10, 3
    %p49 = scmp.ne.s32.totalorder %s44, %s46
    %p50 = scmp.eq.s32.totalorder %s10, 0
    %p51 = por %p49, %p50
    %p52 = scmp.ne.s32.totalorder %s44, %s46
    %p53 = scmp.eq.s32.totalorder %s15, 3
    %p54 = por %p52, %p53
    %p55 = scmp.ne.s32.totalorder %s46, %s47
    %p56 = scmp.eq.s32.totalorder %s15, 0
    %p57 = por %p55, %p56
    %p58 = scmp.ne.s32.totalorder %s46, %s47
    %p59 = scmp.eq.s32.totalorder %s16, 3
    %p60 = por %p58, %p59
    %p62 = scmp.ne.s32.totalorder %s47, %s61
    %p63 = scmp.eq.s32.totalorder %s16, 0
    %p64 = por %p62, %p63
    %s66 = sadd.s32 %s65, 1
    %p69 = scmp.eq.s32.totalorder %s10, 3
    %p70 = scmp.ne.s32.totalorder %s65, %s67
    %p71 = scmp.eq.s32.totalorder %s10, 0
    %p72 = por %p70, %p71
    %p73 = scmp.ne.s32.totalorder %s65, %s67
    %p74 = scmp.eq.s32.totalorder %s15, 3
    %p75 = por %p73, %p74
    %p76 = scmp.ne.s32.totalorder %s67, %s68
    %p77 = scmp.eq.s32.totalorder %s15, 0
    %p78 = por %p76, %p77
    %p79 = scmp.ne.s32.totalorder %s67, %s68
    %p80 = scmp.eq.s32.totalorder %s16, 3
    %p81 = por %p79, %p80
    %p83 = scmp.ne.s32.totalorder %s68, %s82
    %p84 = scmp.eq.s32.totalorder %s16, 0
    %p85 = por %p83, %p84
    %s87 = sadd.s32 %s86, 1
    %p90 = scmp.eq.s32.totalorder %s10, 3
    %p91 = scmp.ne.s32.totalorder %s86, %s88
    %p92 = scmp.eq.s32.totalorder %s10, 0
    %p93 = por %p91, %p92
    %p94 = scmp.ne.s32.totalorder %s86, %s88
    %p95 = scmp.eq.s32.totalorder %s15, 3
    %p96 = por %p94, %p95
    %p97 = scmp.ne.s32.totalorder %s88, %s89
    %p98 = scmp.eq.s32.totalorder %s15, 0
    %p99 = por %p97, %p98
    %p100 = scmp.ne.s32.totalorder %s88, %s89
    %p101 = scmp.eq.s32.totalorder %s16, 3
    %p102 = por %p100, %p101
    %p104 = scmp.ne.s32.totalorder %s89, %s103
    %p105 = scmp.eq.s32.totalorder %s16, 0
    %p106 = por %p104, %p105
    %s107 = ssub.s32 %s10, %s17
    %p108 = scmp.eq.s32.totalorder %s107, 0
    %s110 = sadd.s32 %s109, 1
    %s111 = scalar_select %p108, %s109, %s110
    %p114 = pneg %p108
    %p115 = scmp.eq.s32.totalorder %s10, 3
    %p116 = por %p114, %p115
    %p117 = scmp.ne.s32.totalorder %s109, %s112
    %p118 = scmp.eq.s32.totalorder %s10, 0
    %p119 = por %p117, %p118
    %p120 = scmp.ne.s32.totalorder %s109, %s112
    %p121 = scmp.eq.s32.totalorder %s15, 3
    %p122 = por %p120, %p121
    %p123 = scmp.ne.s32.totalorder %s112, %s113
    %p124 = scmp.eq.s32.totalorder %s15, 0
    %p125 = por %p123, %p124
    %p126 = scmp.ne.s32.totalorder %s112, %s113
    %p127 = scmp.eq.s32.totalorder %s16, 3
    %p128 = por %p126, %p127
    %p130 = scmp.ne.s32.totalorder %s113, %s129
    %p131 = scmp.eq.s32.totalorder %s16, 0
    %p132 = por %p130, %p131
    %p133 = scmp.le.s32.totalorder 1, %s10
    %p134 = scmp.lt.s32.totalorder %s10, 5
    %p135 = pnand %p133, %p134
    %p136 = pneg %p135
    // Predicated region
    $region9: #{tpu_custom_call.1} parent=5 // pred_check
      _
    $region10: #{tpu_custom_call.1} parent=5 // pred_check_branch
      %138 = sbr.rel (%p135) target = $region12
    $region11: #{tpu_custom_call.1} parent=5 // pred_region
      %s139 = ssub.s32 %s10, 1
      // Predicated region
      $region13: #{tpu_custom_call.1} parent=11 // pred_check
        %p140 = pneg %p57
      $region14: #{tpu_custom_call.1} parent=11 // pred_check_branch
        %142 = sbr.rel (%p140) target = $region16
      $region15: #{tpu_custom_call.1} parent=11 // pred_region
        _
      $region16: #{tpu_custom_call.1} parent=11 // pred_fallthru
        _
      // Predicated region
      $region17: #{tpu_custom_call.1} parent=11 // pred_check
        %p143 = pneg %p78
      $region18: #{tpu_custom_call.1} parent=11 // pred_check_branch
        %145 = sbr.rel (%p143) target = $region20
      $region19: #{tpu_custom_call.1} parent=11 // pred_region
        _
      $region20: #{tpu_custom_call.1} parent=11 // pred_fallthru
        _
      // Predicated region
      $region21: #{tpu_custom_call.1} parent=11 // pred_check
        %p146 = pneg %p99
      $region22: #{tpu_custom_call.1} parent=11 // pred_check_branch
        %148 = sbr.rel (%p146) target = $region24
      $region23: #{tpu_custom_call.1} parent=11 // pred_region
        _
      $region24: #{tpu_custom_call.1} parent=11 // pred_fallthru
        _
    $region12: #{tpu_custom_call.1} parent=5 // pred_fallthru
      _
    %p149 = scmp.lt.s32.totalorder %s10, 4
    // Predicated region
    $region25: #{tpu_custom_call.1} parent=5 // pred_check
      %p150 = pneg %p149
    $region26: #{tpu_custom_call.1} parent=5 // pred_check_branch
      %152 = sbr.rel (%p150) target = $region28
    $region27: #{tpu_custom_call.1} parent=5 // pred_region
      // Predicated region
      $region29: #{tpu_custom_call.1} parent=27 // pred_check
        %p153 = pneg %p30
      $region30: #{tpu_custom_call.1} parent=27 // pred_check_branch
        %155 = sbr.rel (%p153) target = $region32
      $region31: #{tpu_custom_call.1} parent=27 // pred_region
        %s156 = smul.u32 4, %s10
        %p157 = scmp.lt.s32.totalorder %s156, 15
        %s158 = scalar_select %p157, %s156, 15
        %s159 = smul.addr %s158, 4
        %s160 = scalar_lea.vmem %s0, %s159
        %s161 = smul.u32 4, %s10
      $region32: #{tpu_custom_call.1} parent=27 // pred_fallthru
        _
    $region28: #{tpu_custom_call.1} parent=5 // pred_fallthru
      _
    %p162 = scmp.le.s32.totalorder 1, %s10
    %p163 = scmp.lt.s32.totalorder %s10, 5
    %p164 = pnand %p162, %p163
    %p165 = pneg %p164
    // Predicated region
    $region33: #{tpu_custom_call.1} parent=5 // pred_check
      _
    $region34: #{tpu_custom_call.1} parent=5 // pred_check_branch
      %167 = sbr.rel (%p164) target = $region36
    $region35: #{tpu_custom_call.1} parent=5 // pred_region
      %s168 = ssub.s32 %s10, 1
      %s169 = smul.u32 4, %s15
      %p170 = scmp.lt.s32.totalorder %s169, 15
      %s171 = scalar_select %p170, %s169, 15
      %s172 = smul.addr %s171, 4
      %s173 = scalar_lea.vmem %s0, %s172
      %p174 = pneg %p36
      %p175 = pneg %p33
      %p176 = pneg %p57
      %p177 = pneg %p54
      %p178 = pneg %p78
      %p179 = pneg %p75
      %p180 = pneg %p99
      %p181 = pneg %p96
      %p182 = pneg %p125
      %p183 = pneg %p122
      %s184 = smul.u32 4, %s15
      %p185 = scmp.lt.s32.totalorder %s184, 15
      %s186 = scalar_select %p185, %s184, 15
      %s187 = smul.addr %s186, 8
      %s188 = scalar_lea.vmem %s4, %s187
      %s189 = smul.u32 4, %s15
      %p190 = scmp.lt.s32.totalorder %s189, 15
      %s191 = scalar_select %p190, %s189, 15
      %s192 = smul.addr %s191, 4
      %s193 = scalar_lea.vmem %s0, %s192
      %s194 = smul.u32 4, %s15
      %s195 = smul.u32 4, %s15
      %p196 = scmp.lt.s32.totalorder %s195, 15
      %s197 = scalar_select %p196, %s195, 15
      %s198 = smul.addr %s197, 8
      %s199 = scalar_lea.vmem %s4, %s198
      %s200 = smul.u32 4, %s15
      %v202 = vld [vmem:[%s193] sm:$0xf]
      %v203 = vld [vmem:[%s193 + $0x4] sm:$0xf]
      %v204 = vld [vmem:[%s193 + $0x8] sm:$0xf]
      %v205 = vld [vmem:[%s193 + $0xc] sm:$0xf]
      %v206 = vld [vmem:[%s1] sm:$0xff]
      %v207 = vld [vmem:[%s1 + $0x8] sm:$0xff]
      %v208 = vld [vmem:[%s1 + $0x10] sm:$0xf]
      %v209 = vld [vmem:[%s1 + $0x14] sm:$0xff]
      %v210 = vld [vmem:[%s1 + $0x1c] sm:$0xff]
      %v211 = vld [vmem:[%s1 + $0x24] sm:$0xf]
      %v212 = vld [vmem:[%s2] sm:$0x1f]
      %v214 = vlaneseq
      %v215 = vshrl.u32 %v214, 7
      %v216 = vsub.s32 0, %v215
      %v217 = vrot.slane %v212, %v216
      %v218 = vlaneseq
      %v219 = vshrl.u32 %v218, 7
      %v220 = vsub.s32 1, %v219
      %v221 = vrot.slane %v212, %v220
      %v222 = vlaneseq
      %v223 = vshrl.u32 %v222, 7
      %v224 = vsub.s32 2, %v223
      %v225 = vrot.slane %v212, %v224
      %v226 = vlaneseq
      %v227 = vshrl.u32 %v226, 7
      %v228 = vsub.s32 3, %v227
      %v229 = vrot.slane %v212, %v228
      %v230 = vlaneseq
      %v231 = vshrl.u32 %v230, 7
      %v232 = vsub.s32 4, %v231
      %v233 = vrot.slane %v212, %v232
      %v243 = vunpack.c.l.b16 %v202
      %v244 = vunpack.c.l.b16 %v203
      %v245 = vunpack.c.l.b16 %v204
      %v246 = vunpack.c.l.b16 %v205
      %v247 = vpack.c.b16 %v244, %v243
      %v248 = vpack.c.b16 %v246, %v245
      %v255 = vunpack.c.l.b16 %v206
      %v256 = vunpack.c.h.b16 %v206
      %v257 = vunpack.c.l.b16 %v207
      %v258 = vunpack.c.h.b16 %v207
      %v259 = vunpack.c.l.b16 %v208
      %v260 = vunpack.c.l.b16 %v209
      %v261 = vunpack.c.h.b16 %v209
      %v262 = vunpack.c.l.b16 %v210
      %v263 = vunpack.c.h.b16 %v210
      %v264 = vunpack.c.l.b16 %v211
      %v265 = vpack.c.b16 %v260, %v255
      %v266 = vpack.c.b16 %v261, %v256
      %v267 = vpack.c.b16 %v262, %v257
      %v268 = vpack.c.b16 %v263, %v258
      %v269 = vpack.c.b16 %v264, %v259
      %vm275 = vcmask 130048
      %v277 = vsel %vm275, %v247, 0
      %v280 = vsel %vm275, %v248, 0
      %282 = vmatprep.subr.bf16.mxu0 %v266
      %283 = vmatpush1.bf16.msra.mxu0 %v265
      %284 = vmatprep.subr.bf16.mxu0 0
      %285 = vmatpush1.bf16.msra.mxu0 0
      %286 = vmatprep.subr.bf16.mxu0 0
      %287 = vmatpush1.bf16.msra.mxu0 0
      %288 = vmatprep.subr.bf16.mxu0 0
      %289 = vmatpush1.bf16.msra.mxu0 0
      %290 = vmatprep.subr.bf16.mxu0 0
      %291 = vmatpush1.bf16.msra.mxu0 0
      %292 = vmatprep.subr.bf16.mxu0 0
      %293 = vmatpush1.bf16.msra.mxu0 0
      %294 = vmatprep.subr.bf16.mxu0 0
      %295 = vmatpush1.bf16.msra.mxu0 0
      %296 = vmatprep.subr.bf16.mxu0 0
      %297 = vmatpush1.bf16.msra.mxu0 0
      %298 = vmatprep.subr.bf16.mxu0 0
      %299 = vmatpush1.bf16.msra.mxu0 0
      %300 = vmatprep.subr.bf16.mxu0 0
      %301 = vmatpush1.bf16.msra.mxu0 0
      %302 = vmatprep.subr.bf16.mxu0 0
      %303 = vmatpush1.bf16.msra.mxu0 0
      %304 = vmatprep.subr.bf16.mxu0 0
      %305 = vmatpush1.bf16.msra.mxu0 0
      %306 = vmatprep.subr.bf16.mxu0 0
      %307 = vmatpush1.bf16.msra.mxu0 0
      %308 = vmatprep.subr.bf16.mxu0 0
      %309 = vmatpush1.bf16.msra.mxu0 0
      %310 = vmatprep.subr.bf16.mxu0 0
      %311 = vmatpush1.bf16.msra.mxu0 0
      %312 = vmatprep.subr.bf16.mxu0 0
      %313 = vmatpush1.bf16.msra.mxu0 0
      %314 = vmatprep.mubr.bf16.mxu0 0
      %315 = vmatmul.mubr.bf16.gmra.mrb[0].mxu0 %v277
      %v316 = vpop.f32.mrb[0].mxu0
      %v317 = vadd.f32 %v217, %v316
      %v318 = vpop.f32.mrb[0].mxu0
      %v319 = vadd.f32 %v221, %v318
      %v320 = vpop.f32.mrb[0].mxu0
      %v321 = vadd.f32 %v217, %v320
      %v322 = vpop.f32.mrb[0].mxu0
      %v323 = vadd.f32 %v221, %v322
      %324 = vmatprep.mubr.bf16.mxu0 0
      %325 = vmatmul.mubr.bf16.gmra.mrb[0].mxu0 %v280
      %v326 = vpop.f32.mrb[0].mxu0
      %v327 = vadd.f32 %v217, %v326
      %v328 = vpop.f32.mrb[0].mxu0
      %v329 = vadd.f32 %v221, %v328
      %v330 = vpop.f32.mrb[0].mxu0
      %v331 = vadd.f32 %v217, %v330
      %v332 = vpop.f32.mrb[0].mxu0
      %v333 = vadd.f32 %v221, %v332
      %334 = vdwg.mxu0
      %335 = vmatprep.subr.bf16.mxu0 %v268
      %336 = vmatpush1.bf16.msra.mxu0 %v267
      %337 = vmatprep.subr.bf16.mxu0 0
      %338 = vmatpush1.bf16.msra.mxu0 0
      %339 = vmatprep.subr.bf16.mxu0 0
      %340 = vmatpush1.bf16.msra.mxu0 0
      %341 = vmatprep.subr.bf16.mxu0 0
      %342 = vmatpush1.bf16.msra.mxu0 0
      %343 = vmatprep.subr.bf16.mxu0 0
      %344 = vmatpush1.bf16.msra.mxu0 0
      %345 = vmatprep.subr.bf16.mxu0 0
      %346 = vmatpush1.bf16.msra.mxu0 0
      %347 = vmatprep.subr.bf16.mxu0 0
      %348 = vmatpush1.bf16.msra.mxu0 0
      %349 = vmatprep.subr.bf16.mxu0 0
      %350 = vmatpush1.bf16.msra.mxu0 0
      %351 = vmatprep.subr.bf16.mxu0 0
      %352 = vmatpush1.bf16.msra.mxu0 0
      %353 = vmatprep.subr.bf16.mxu0 0
      %354 = vmatpush1.bf16.msra.mxu0 0
      %355 = vmatprep.subr.bf16.mxu0 0
      %356 = vmatpush1.bf16.msra.mxu0 0
      %357 = vmatprep.subr.bf16.mxu0 0
      %358 = vmatpush1.bf16.msra.mxu0 0
      %359 = vmatprep.subr.bf16.mxu0 0
      %360 = vmatpush1.bf16.msra.mxu0 0
      %361 = vmatprep.subr.bf16.mxu0 0
      %362 = vmatpush1.bf16.msra.mxu0 0
      %363 = vmatprep.subr.bf16.mxu0 0
      %364 = vmatpush1.bf16.msra.mxu0 0
      %365 = vmatprep.subr.bf16.mxu0 0
      %366 = vmatpush1.bf16.msra.mxu0 0
      %367 = vmatprep.mubr.bf16.mxu0 0
      %368 = vmatmul.mubr.bf16.gmra.mrb[0].mxu0 %v277
      %v369 = vpop.f32.mrb[0].mxu0
      %v370 = vadd.f32 %v225, %v369
      %v371 = vpop.f32.mrb[0].mxu0
      %v372 = vadd.f32 %v229, %v371
      %v373 = vpop.f32.mrb[0].mxu0
      %v374 = vadd.f32 %v225, %v373
      %v375 = vpop.f32.mrb[0].mxu0
      %v376 = vadd.f32 %v229, %v375
      %377 = vmatprep.mubr.bf16.mxu0 0
      %378 = vmatmul.mubr.bf16.gmra.mrb[0].mxu0 %v280
      %v379 = vpop.f32.mrb[0].mxu0
      %v380 = vadd.f32 %v225, %v379
      %v381 = vpop.f32.mrb[0].mxu0
      %v382 = vadd.f32 %v229, %v381
      %v383 = vpop.f32.mrb[0].mxu0
      %v384 = vadd.f32 %v225, %v383
      %v385 = vpop.f32.mrb[0].mxu0
      %v386 = vadd.f32 %v229, %v385
      %387 = vdwg.mxu0
      %388 = vmatprep.subr.bf16.mxu0 0
      %389 = vmatpush1.bf16.msra.mxu0 %v269
      %390 = vmatprep.subr.bf16.mxu0 0
      %391 = vmatpush1.bf16.msra.mxu0 0
      %392 = vmatprep.subr.bf16.mxu0 0
      %393 = vmatpush1.bf16.msra.mxu0 0
      %394 = vmatprep.subr.bf16.mxu0 0
      %395 = vmatpush1.bf16.msra.mxu0 0
      %396 = vmatprep.subr.bf16.mxu0 0
      %397 = vmatpush1.bf16.msra.mxu0 0
      %398 = vmatprep.subr.bf16.mxu0 0
      %399 = vmatpush1.bf16.msra.mxu0 0
      %400 = vmatprep.subr.bf16.mxu0 0
      %401 = vmatpush1.bf16.msra.mxu0 0
      %402 = vmatprep.subr.bf16.mxu0 0
      %403 = vmatpush1.bf16.msra.mxu0 0
      %404 = vmatprep.subr.bf16.mxu0 0
      %405 = vmatpush1.bf16.msra.mxu0 0
      %406 = vmatprep.subr.bf16.mxu0 0
      %407 = vmatpush1.bf16.msra.mxu0 0
      %408 = vmatprep.subr.bf16.mxu0 0
      %409 = vmatpush1.bf16.msra.mxu0 0
      %410 = vmatprep.subr.bf16.mxu0 0
      %411 = vmatpush1.bf16.msra.mxu0 0
      %412 = vmatprep.subr.bf16.mxu0 0
      %413 = vmatpush1.bf16.msra.mxu0 0
      %414 = vmatprep.subr.bf16.mxu0 0
      %415 = vmatpush1.bf16.msra.mxu0 0
      %416 = vmatprep.subr.bf16.mxu0 0
      %417 = vmatpush1.bf16.msra.mxu0 0
      %418 = vmatprep.subr.bf16.mxu0 0
      %419 = vmatpush1.bf16.msra.mxu0 0
      %420 = vmatprep.mubr.bf16.mxu0 0
      %421 = vmatmul.mubr.bf16.gmra.mrb[0].mxu0 %v277
      %v422 = vpop.f32.mrb[0].mxu0
      %v423 = vadd.f32 %v233, %v422
      %v424 = vpop.f32.mrb[0].mxu0
      %v425 = vpop.f32.mrb[0].mxu0
      %v426 = vadd.f32 %v233, %v425
      %v427 = vpop.f32.mrb[0].mxu0
      %428 = vmatprep.mubr.bf16.mxu0 0
      %429 = vmatmul.mubr.bf16.gmra.mrb[0].mxu0 %v280
      %v430 = vpop.f32.mrb[0].mxu0
      %v431 = vadd.f32 %v233, %v430
      %v432 = vpop.f32.mrb[0].mxu0
      %v433 = vpop.f32.mrb[0].mxu0
      %v434 = vadd.f32 %v233, %v433
      %v435 = vpop.f32.mrb[0].mxu0
      %436 = vdwg.mxu0
      %v437 = vld [vmem:[%s3] sm:$0xf]
      %v438 = vld [vmem:[%s3 + $0x4] sm:$0xf]
      %v439 = vpack.c.bf16 %v323, %v319
      %v442 = vunpack.c.l.b16 %v437
      %v443 = vunpack.c.l.b16 %v438
      %v444 = vpack.c.b16 %v443, %v442
      %v446 = vsel %vm275, %v444, 0
      %448 = vmatprep.subr.bf16.mxu0 0
      %449 = vmatpush1.bf16.msra.mxu0 %v439
      %450 = vmatprep.subr.bf16.mxu0 0
      %451 = vmatpush1.bf16.msra.mxu0 0
      %452 = vmatprep.subr.bf16.mxu0 0
      %453 = vmatpush1.bf16.msra.mxu0 0
      %454 = vmatprep.subr.bf16.mxu0 0
      %455 = vmatpush1.bf16.msra.mxu0 0
      %456 = vmatprep.subr.bf16.mxu0 0
      %457 = vmatpush1.bf16.msra.mxu0 0
      %458 = vmatprep.subr.bf16.mxu0 0
      %459 = vmatpush1.bf16.msra.mxu0 0
      %460 = vmatprep.subr.bf16.mxu0 0
      %461 = vmatpush1.bf16.msra.mxu0 0
      %462 = vmatprep.subr.bf16.mxu0 0
      %463 = vmatpush1.bf16.msra.mxu0 0
      %464 = vmatprep.subr.bf16.mxu0 0
      %465 = vmatpush1.bf16.msra.mxu0 0
      %466 = vmatprep.subr.bf16.mxu0 0
      %467 = vmatpush1.bf16.msra.mxu0 0
      %468 = vmatprep.subr.bf16.mxu0 0
      %469 = vmatpush1.bf16.msra.mxu0 0
      %470 = vmatprep.subr.bf16.mxu0 0
      %471 = vmatpush1.bf16.msra.mxu0 0
      %472 = vmatprep.subr.bf16.mxu0 0
      %473 = vmatpush1.bf16.msra.mxu0 0
      %474 = vmatprep.subr.bf16.mxu0 0
      %475 = vmatpush1.bf16.msra.mxu0 0
      %476 = vmatprep.subr.bf16.mxu0 0
      %477 = vmatpush1.bf16.msra.mxu0 0
      %478 = vmatprep.subr.bf16.mxu0 0
      %479 = vmatpush1.bf16.msra.mxu0 0
      %480 = vmatprep.mubr.bf16.mxu0 0
      %481 = vmatmul.mubr.bf16.gmra.mrb[0].mxu0 %v446
      %v482 = vpop.f32.mrb[0].mxu0
      %v483 = vadd.f32 0.0, %v482
      %v484 = vpop.f32.mrb[0].mxu0
      %v485 = vpop.f32.mrb[0].mxu0
      %v486 = vadd.f32 0.0, %v485
      %v487 = vpop.f32.mrb[0].mxu0
      %488 = vdwg.mxu0
      %v489 = vadd.f32 %v317, %v483
      %v490 = vadd.f32 %v321, %v486
      %s491 = scalar_lea.vmem %s3, 8
      %v492 = vld [vmem:[%s491] sm:$0xf]
      %v493 = vld [vmem:[%s491 + $0x4] sm:$0xf]
      %v494 = vpack.c.bf16 %v374, %v370
      %v497 = vunpack.c.l.b16 %v492
      %v498 = vunpack.c.l.b16 %v493
      %v499 = vpack.c.b16 %v498, %v497
      %v501 = vsel %vm275, %v499, 0
      %503 = vmatprep.subr.bf16.mxu0 0
      %504 = vmatpush1.bf16.msra.mxu0 %v494
      %505 = vmatprep.subr.bf16.mxu0 0
      %506 = vmatpush1.bf16.msra.mxu0 0
      %507 = vmatprep.subr.bf16.mxu0 0
      %508 = vmatpush1.bf16.msra.mxu0 0
      %509 = vmatprep.subr.bf16.mxu0 0
      %510 = vmatpush1.bf16.msra.mxu0 0
      %511 = vmatprep.subr.bf16.mxu0 0
      %512 = vmatpush1.bf16.msra.mxu0 0
      %513 = vmatprep.subr.bf16.mxu0 0
      %514 = vmatpush1.bf16.msra.mxu0 0
      %515 = vmatprep.subr.bf16.mxu0 0
      %516 = vmatpush1.bf16.msra.mxu0 0
      %517 = vmatprep.subr.bf16.mxu0 0
      %518 = vmatpush1.bf16.msra.mxu0 0
      %519 = vmatprep.subr.bf16.mxu0 0
      %520 = vmatpush1.bf16.msra.mxu0 0
      %521 = vmatprep.subr.bf16.mxu0 0
      %522 = vmatpush1.bf16.msra.mxu0 0
      %523 = vmatprep.subr.bf16.mxu0 0
      %524 = vmatpush1.bf16.msra.mxu0 0
      %525 = vmatprep.subr.bf16.mxu0 0
      %526 = vmatpush1.bf16.msra.mxu0 0
      %527 = vmatprep.subr.bf16.mxu0 0
      %528 = vmatpush1.bf16.msra.mxu0 0
      %529 = vmatprep.subr.bf16.mxu0 0
      %530 = vmatpush1.bf16.msra.mxu0 0
      %531 = vmatprep.subr.bf16.mxu0 0
      %532 = vmatpush1.bf16.msra.mxu0 0
      %533 = vmatprep.subr.bf16.mxu0 0
      %534 = vmatpush1.bf16.msra.mxu0 0
      %535 = vmatprep.mubr.bf16.mxu0 0
      %536 = vmatmul.mubr.bf16.gmra.mrb[0].mxu0 %v501
      %v537 = vpop.f32.mrb[0].mxu0
      %v538 = vadd.f32 0.0, %v537
      %v539 = vpop.f32.mrb[0].mxu0
      %v540 = vpop.f32.mrb[0].mxu0
      %v541 = vadd.f32 0.0, %v540
      %v542 = vpop.f32.mrb[0].mxu0
      %543 = vdwg.mxu0
      %v544 = vadd.f32 %v489, %v538
      %v545 = vadd.f32 %v490, %v541
      %s546 = scalar_lea.vmem %s3, 16
      %v547 = vld [vmem:[%s546] sm:$0xf]
      %v548 = vld [vmem:[%s546 + $0x4] sm:$0xf]
      %v549 = vpack.c.bf16 %v376, %v372
      %v552 = vunpack.c.l.b16 %v547
      %v553 = vunpack.c.l.b16 %v548
      %v554 = vpack.c.b16 %v553, %v552
      %v556 = vsel %vm275, %v554, 0
      %558 = vmatprep.subr.bf16.mxu0 0
      %559 = vmatpush1.bf16.msra.mxu0 %v549
      %560 = vmatprep.subr.bf16.mxu0 0
      %561 = vmatpush1.bf16.msra.mxu0 0
      %562 = vmatprep.subr.bf16.mxu0 0
      %563 = vmatpush1.bf16.msra.mxu0 0
      %564 = vmatprep.subr.bf16.mxu0 0
      %565 = vmatpush1.bf16.msra.mxu0 0
      %566 = vmatprep.subr.bf16.mxu0 0
      %567 = vmatpush1.bf16.msra.mxu0 0
      %568 = vmatprep.subr.bf16.mxu0 0
      %569 = vmatpush1.bf16.msra.mxu0 0
      %570 = vmatprep.subr.bf16.mxu0 0
      %571 = vmatpush1.bf16.msra.mxu0 0
      %572 = vmatprep.subr.bf16.mxu0 0
      %573 = vmatpush1.bf16.msra.mxu0 0
      %574 = vmatprep.subr.bf16.mxu0 0
      %575 = vmatpush1.bf16.msra.mxu0 0
      %576 = vmatprep.subr.bf16.mxu0 0
      %577 = vmatpush1.bf16.msra.mxu0 0
      %578 = vmatprep.subr.bf16.mxu0 0
      %579 = vmatpush1.bf16.msra.mxu0 0
      %580 = vmatprep.subr.bf16.mxu0 0
      %581 = vmatpush1.bf16.msra.mxu0 0
      %582 = vmatprep.subr.bf16.mxu0 0
      %583 = vmatpush1.bf16.msra.mxu0 0
      %584 = vmatprep.subr.bf16.mxu0 0
      %585 = vmatpush1.bf16.msra.mxu0 0
      %586 = vmatprep.subr.bf16.mxu0 0
      %587 = vmatpush1.bf16.msra.mxu0 0
      %588 = vmatprep.subr.bf16.mxu0 0
      %589 = vmatpush1.bf16.msra.mxu0 0
      %590 = vmatprep.mubr.bf16.mxu0 0
      %591 = vmatmul.mubr.bf16.gmra.mrb[0].mxu0 %v556
      %v592 = vpop.f32.mrb[0].mxu0
      %v593 = vadd.f32 0.0, %v592
      %v594 = vpop.f32.mrb[0].mxu0
      %v595 = vpop.f32.mrb[0].mxu0
      %v596 = vadd.f32 0.0, %v595
      %v597 = vpop.f32.mrb[0].mxu0
      %598 = vdwg.mxu0
      %v599 = vadd.f32 %v544, %v593
      %v600 = vadd.f32 %v545, %v596
      %s601 = scalar_lea.vmem %s3, 24
      %v602 = vld [vmem:[%s601] sm:$0xf]
      %v603 = vld [vmem:[%s601 + $0x4] sm:$0xf]
      %v604 = vpack.c.bf16 %v426, %v423
      %v607 = vunpack.c.l.b16 %v602
      %v608 = vunpack.c.l.b16 %v603
      %v609 = vpack.c.b16 %v608, %v607
      %v611 = vsel %vm275, %v609, 0
      %613 = vmatprep.subr.bf16.mxu0 0
      %614 = vmatpush1.bf16.msra.mxu0 %v604
      %615 = vmatprep.subr.bf16.mxu0 0
      %616 = vmatpush1.bf16.msra.mxu0 0
      %617 = vmatprep.subr.bf16.mxu0 0
      %618 = vmatpush1.bf16.msra.mxu0 0
      %619 = vmatprep.subr.bf16.mxu0 0
      %620 = vmatpush1.bf16.msra.mxu0 0
      %621 = vmatprep.subr.bf16.mxu0 0
      %622 = vmatpush1.bf16.msra.mxu0 0
      %623 = vmatprep.subr.bf16.mxu0 0
      %624 = vmatpush1.bf16.msra.mxu0 0
      %625 = vmatprep.subr.bf16.mxu0 0
      %626 = vmatpush1.bf16.msra.mxu0 0
      %627 = vmatprep.subr.bf16.mxu0 0
      %628 = vmatpush1.bf16.msra.mxu0 0
      %629 = vmatprep.subr.bf16.mxu0 0
      %630 = vmatpush1.bf16.msra.mxu0 0
      %631 = vmatprep.subr.bf16.mxu0 0
      %632 = vmatpush1.bf16.msra.mxu0 0
      %633 = vmatprep.subr.bf16.mxu0 0
      %634 = vmatpush1.bf16.msra.mxu0 0
      %635 = vmatprep.subr.bf16.mxu0 0
      %636 = vmatpush1.bf16.msra.mxu0 0
      %637 = vmatprep.subr.bf16.mxu0 0
      %638 = vmatpush1.bf16.msra.mxu0 0
      %639 = vmatprep.subr.bf16.mxu0 0
      %640 = vmatpush1.bf16.msra.mxu0 0
      %641 = vmatprep.subr.bf16.mxu0 0
      %642 = vmatpush1.bf16.msra.mxu0 0
      %643 = vmatprep.subr.bf16.mxu0 0
      %644 = vmatpush1.bf16.msra.mxu0 0
      %645 = vmatprep.mubr.bf16.mxu0 0
      %646 = vmatmul.mubr.bf16.gmra.mrb[0].mxu0 %v611
      %v647 = vpop.f32.mrb[0].mxu0
      %v648 = vadd.f32 0.0, %v647
      %v649 = vpop.f32.mrb[0].mxu0
      %v650 = vpop.f32.mrb[0].mxu0
      %v651 = vadd.f32 0.0, %v650
      %v652 = vpop.f32.mrb[0].mxu0
      %653 = vdwg.mxu0
      %v654 = vadd.f32 %v599, %v648
      %v655 = vadd.f32 %v600, %v651
      %vm656 = vcmask 261120
      %657 = vst.msk [vmem:[%s199] sm:$0xff] %vm656, %v654
      %658 = vst.msk [vmem:[%s199 + $0x8] sm:$0xff] %vm656, %v655
      %v659 = vld [vmem:[%s3] sm:$0xf]
      %v660 = vld [vmem:[%s3 + $0x4] sm:$0xf]
      %v661 = vpack.c.bf16 %v333, %v329
      %v664 = vunpack.c.l.b16 %v659
      %v665 = vunpack.c.l.b16 %v660
      %v666 = vpack.c.b16 %v665, %v664
      %v668 = vsel %vm275, %v666, 0
      %670 = vmatprep.subr.bf16.mxu0 0
      %671 = vmatpush1.bf16.msra.mxu0 %v661
      %672 = vmatprep.subr.bf16.mxu0 0
      %673 = vmatpush1.bf16.msra.mxu0 0
      %674 = vmatprep.subr.bf16.mxu0 0
      %675 = vmatpush1.bf16.msra.mxu0 0
      %676 = vmatprep.subr.bf16.mxu0 0
      %677 = vmatpush1.bf16.msra.mxu0 0
      %678 = vmatprep.subr.bf16.mxu0 0
      %679 = vmatpush1.bf16.msra.mxu0 0
      %680 = vmatprep.subr.bf16.mxu0 0
      %681 = vmatpush1.bf16.msra.mxu0 0
      %682 = vmatprep.subr.bf16.mxu0 0
      %683 = vmatpush1.bf16.msra.mxu0 0
      %684 = vmatprep.subr.bf16.mxu0 0
      %685 = vmatpush1.bf16.msra.mxu0 0
      %686 = vmatprep.subr.bf16.mxu0 0
      %687 = vmatpush1.bf16.msra.mxu0 0
      %688 = vmatprep.subr.bf16.mxu0 0
      %689 = vmatpush1.bf16.msra.mxu0 0
      %690 = vmatprep.subr.bf16.mxu0 0
      %691 = vmatpush1.bf16.msra.mxu0 0
      %692 = vmatprep.subr.bf16.mxu0 0
      %693 = vmatpush1.bf16.msra.mxu0 0
      %694 = vmatprep.subr.bf16.mxu0 0
      %695 = vmatpush1.bf16.msra.mxu0 0
      %696 = vmatprep.subr.bf16.mxu0 0
      %697 = vmatpush1.bf16.msra.mxu0 0
      %698 = vmatprep.subr.bf16.mxu0 0
      %699 = vmatpush1.bf16.msra.mxu0 0
      %700 = vmatprep.subr.bf16.mxu0 0
      %701 = vmatpush1.bf16.msra.mxu0 0
      %702 = vmatprep.mubr.bf16.mxu0 0
      %703 = vmatmul.mubr.bf16.gmra.mrb[0].mxu0 %v668
      %v704 = vpop.f32.mrb[0].mxu0
      %v705 = vadd.f32 0.0, %v704
      %v706 = vpop.f32.mrb[0].mxu0
      %v707 = vpop.f32.mrb[0].mxu0
      %v708 = vadd.f32 0.0, %v707
      %v709 = vpop.f32.mrb[0].mxu0
      %710 = vdwg.mxu0
      %v711 = vadd.f32 %v327, %v705
      %v712 = vadd.f32 %v331, %v708
      %v713 = vld [vmem:[%s491] sm:$0xf]
      %v714 = vld [vmem:[%s491 + $0x4] sm:$0xf]
      %v715 = vpack.c.bf16 %v384, %v380
      %v718 = vunpack.c.l.b16 %v713
      %v719 = vunpack.c.l.b16 %v714
      %v720 = vpack.c.b16 %v719, %v718
      %v722 = vsel %vm275, %v720, 0
      %724 = vmatprep.subr.bf16.mxu0 0
      %725 = vmatpush1.bf16.msra.mxu0 %v715
      %726 = vmatprep.subr.bf16.mxu0 0
      %727 = vmatpush1.bf16.msra.mxu0 0
      %728 = vmatprep.subr.bf16.mxu0 0
      %729 = vmatpush1.bf16.msra.mxu0 0
      %730 = vmatprep.subr.bf16.mxu0 0
      %731 = vmatpush1.bf16.msra.mxu0 0
      %732 = vmatprep.subr.bf16.mxu0 0
      %733 = vmatpush1.bf16.msra.mxu0 0
      %734 = vmatprep.subr.bf16.mxu0 0
      %735 = vmatpush1.bf16.msra.mxu0 0
      %736 = vmatprep.subr.bf16.mxu0 0
      %737 = vmatpush1.bf16.msra.mxu0 0
      %738 = vmatprep.subr.bf16.mxu0 0
      %739 = vmatpush1.bf16.msra.mxu0 0
      %740 = vmatprep.subr.bf16.mxu0 0
      %741 = vmatpush1.bf16.msra.mxu0 0
      %742 = vmatprep.subr.bf16.mxu0 0
      %743 = vmatpush1.bf16.msra.mxu0 0
      %744 = vmatprep.subr.bf16.mxu0 0
      %745 = vmatpush1.bf16.msra.mxu0 0
      %746 = vmatprep.subr.bf16.mxu0 0
      %747 = vmatpush1.bf16.msra.mxu0 0
      %748 = vmatprep.subr.bf16.mxu0 0
      %749 = vmatpush1.bf16.msra.mxu0 0
      %750 = vmatprep.subr.bf16.mxu0 0
      %751 = vmatpush1.bf16.msra.mxu0 0
      %752 = vmatprep.subr.bf16.mxu0 0
      %753 = vmatpush1.bf16.msra.mxu0 0
      %754 = vmatprep.subr.bf16.mxu0 0
      %755 = vmatpush1.bf16.msra.mxu0 0
      %756 = vmatprep.mubr.bf16.mxu0 0
      %757 = vmatmul.mubr.bf16.gmra.mrb[0].mxu0 %v722
      %v758 = vpop.f32.mrb[0].mxu0
      %v759 = vadd.f32 0.0, %v758
      %v760 = vpop.f32.mrb[0].mxu0
      %v761 = vpop.f32.mrb[0].mxu0
      %v762 = vadd.f32 0.0, %v761
      %v763 = vpop.f32.mrb[0].mxu0
      %764 = vdwg.mxu0
      %v765 = vadd.f32 %v711, %v759
      %v766 = vadd.f32 %v712, %v762
      %v767 = vld [vmem:[%s546] sm:$0xf]
      %v768 = vld [vmem:[%s546 + $0x4] sm:$0xf]
      %v769 = vpack.c.bf16 %v386, %v382
      %v772 = vunpack.c.l.b16 %v767
      %v773 = vunpack.c.l.b16 %v768
      %v774 = vpack.c.b16 %v773, %v772
      %v776 = vsel %vm275, %v774, 0
      %778 = vmatprep.subr.bf16.mxu0 0
      %779 = vmatpush1.bf16.msra.mxu0 %v769
      %780 = vmatprep.subr.bf16.mxu0 0
      %781 = vmatpush1.bf16.msra.mxu0 0
      %782 = vmatprep.subr.bf16.mxu0 0
      %783 = vmatpush1.bf16.msra.mxu0 0
      %784 = vmatprep.subr.bf16.mxu0 0
      %785 = vmatpush1.bf16.msra.mxu0 0
      %786 = vmatprep.subr.bf16.mxu0 0
      %787 = vmatpush1.bf16.msra.mxu0 0
      %788 = vmatprep.subr.bf16.mxu0 0
      %789 = vmatpush1.bf16.msra.mxu0 0
      %790 = vmatprep.subr.bf16.mxu0 0
      %791 = vmatpush1.bf16.msra.mxu0 0
      %792 = vmatprep.subr.bf16.mxu0 0
      %793 = vmatpush1.bf16.msra.mxu0 0
      %794 = vmatprep.subr.bf16.mxu0 0
      %795 = vmatpush1.bf16.msra.mxu0 0
      %796 = vmatprep.subr.bf16.mxu0 0
      %797 = vmatpush1.bf16.msra.mxu0 0
      %798 = vmatprep.subr.bf16.mxu0 0
      %799 = vmatpush1.bf16.msra.mxu0 0
      %800 = vmatprep.subr.bf16.mxu0 0
      %801 = vmatpush1.bf16.msra.mxu0 0
      %802 = vmatprep.subr.bf16.mxu0 0
      %803 = vmatpush1.bf16.msra.mxu0 0
      %804 = vmatprep.subr.bf16.mxu0 0
      %805 = vmatpush1.bf16.msra.mxu0 0
      %806 = vmatprep.subr.bf16.mxu0 0
      %807 = vmatpush1.bf16.msra.mxu0 0
      %808 = vmatprep.subr.bf16.mxu0 0
      %809 = vmatpush1.bf16.msra.mxu0 0
      %810 = vmatprep.mubr.bf16.mxu0 0
      %811 = vmatmul.mubr.bf16.gmra.mrb[0].mxu0 %v776
      %v812 = vpop.f32.mrb[0].mxu0
      %v813 = vadd.f32 0.0, %v812
      %v814 = vpop.f32.mrb[0].mxu0
      %v815 = vpop.f32.mrb[0].mxu0
      %v816 = vadd.f32 0.0, %v815
      %v817 = vpop.f32.mrb[0].mxu0
      %818 = vdwg.mxu0
      %v819 = vadd.f32 %v765, %v813
      %v820 = vadd.f32 %v766, %v816
      %v821 = vld [vmem:[%s601] sm:$0xf]
      %v822 = vld [vmem:[%s601 + $0x4] sm:$0xf]
      %v823 = vpack.c.bf16 %v434, %v431
      %v826 = vunpack.c.l.b16 %v821
      %v827 = vunpack.c.l.b16 %v822
      %v828 = vpack.c.b16 %v827, %v826
      %v830 = vsel %vm275, %v828, 0
      %832 = vmatprep.subr.bf16.mxu0 0
      %833 = vmatpush1.bf16.msra.mxu0 %v823
      %834 = vmatprep.subr.bf16.mxu0 0
      %835 = vmatpush1.bf16.msra.mxu0 0
      %836 = vmatprep.subr.bf16.mxu0 0
      %837 = vmatpush1.bf16.msra.mxu0 0
      %838 = vmatprep.subr.bf16.mxu0 0
      %839 = vmatpush1.bf16.msra.mxu0 0
      %840 = vmatprep.subr.bf16.mxu0 0
      %841 = vmatpush1.bf16.msra.mxu0 0
      %842 = vmatprep.subr.bf16.mxu0 0
      %843 = vmatpush1.bf16.msra.mxu0 0
      %844 = vmatprep.subr.bf16.mxu0 0
      %845 = vmatpush1.bf16.msra.mxu0 0
      %846 = vmatprep.subr.bf16.mxu0 0
      %847 = vmatpush1.bf16.msra.mxu0 0
      %848 = vmatprep.subr.bf16.mxu0 0
      %849 = vmatpush1.bf16.msra.mxu0 0
      %850 = vmatprep.subr.bf16.mxu0 0
      %851 = vmatpush1.bf16.msra.mxu0 0
      %852 = vmatprep.subr.bf16.mxu0 0
      %853 = vmatpush1.bf16.msra.mxu0 0
      %854 = vmatprep.subr.bf16.mxu0 0
      %855 = vmatpush1.bf16.msra.mxu0 0
      %856 = vmatprep.subr.bf16.mxu0 0
      %857 = vmatpush1.bf16.msra.mxu0 0
      %858 = vmatprep.subr.bf16.mxu0 0
      %859 = vmatpush1.bf16.msra.mxu0 0
      %860 = vmatprep.subr.bf16.mxu0 0
      %861 = vmatpush1.bf16.msra.mxu0 0
      %862 = vmatprep.subr.bf16.mxu0 0
      %863 = vmatpush1.bf16.msra.mxu0 0
      %864 = vmatprep.mubr.bf16.mxu0 0
      %865 = vmatmul.mubr.bf16.gmra.mrb[0].mxu0 %v830
      %v866 = vpop.f32.mrb[0].mxu0
      %v867 = vadd.f32 0.0, %v866
      %v868 = vpop.f32.mrb[0].mxu0
      %v869 = vpop.f32.mrb[0].mxu0
      %v870 = vadd.f32 0.0, %v869
      %v871 = vpop.f32.mrb[0].mxu0
      %872 = vdwg.mxu0
      %v873 = vadd.f32 %v819, %v867
      %v874 = vadd.f32 %v820, %v870
      %875 = vst.msk [vmem:[%s199 + $0x10] sm:$0xff] %vm656, %v873
      %876 = vst.msk [vmem:[%s199 + $0x18] sm:$0xff] %vm656, %v874
      %s877 = smul.u32 4, %s15
      %p878 = scmp.lt.s32.totalorder %s877, 15
      %s879 = scalar_select %p878, %s877, 15
      %s880 = smul.addr %s879, 8
      %s881 = scalar_lea.vmem %s4, %s880
      // Predicated region
      $region37: #{tpu_custom_call.1} parent=35 // pred_check
        %p882 = pneg %p122
      $region38: #{tpu_custom_call.1} parent=35 // pred_check_branch
        %884 = sbr.rel (%p882) target = $region40
      $region39: #{tpu_custom_call.1} parent=35 // pred_region
        %s885 = smul.u32 4, %s15
      $region40: #{tpu_custom_call.1} parent=35 // pred_fallthru
        _
    $region36: #{tpu_custom_call.1} parent=5 // pred_fallthru
      _
    %p886 = scmp.le.s32.totalorder 2, %s10
    // Predicated region
    $region41: #{tpu_custom_call.1} parent=5 // pred_check
      %p887 = pneg %p886
    $region42: #{tpu_custom_call.1} parent=5 // pred_check_branch
      %889 = sbr.rel (%p887) target = $region44
    $region43: #{tpu_custom_call.1} parent=5 // pred_region
      %s890 = ssub.s32 %s10, 2
      // Predicated region
      $region45: #{tpu_custom_call.1} parent=43 // pred_check
        %p891 = pneg %p128
      $region46: #{tpu_custom_call.1} parent=43 // pred_check_branch
        %893 = sbr.rel (%p891) target = $region48
      $region47: #{tpu_custom_call.1} parent=43 // pred_region
        %s894 = smul.u32 4, %s16
        %p895 = scmp.lt.s32.totalorder %s894, 15
        %s896 = scalar_select %p895, %s894, 15
        %s897 = smul.addr %s896, 8
        %s898 = scalar_lea.vmem %s4, %s897
      $region48: #{tpu_custom_call.1} parent=43 // pred_fallthru
        _
    $region44: #{tpu_custom_call.1} parent=5 // pred_fallthru
      _
  $region6: #{tpu_custom_call.1} parent=0 // loop_footer
    %s14 = sadd.s32 1, %s10
  $region7: #{tpu_custom_call.1} parent=0 // loop_footer_branch
    %9 = sbr.rel target = $region3
  $region8: #{tpu_custom_call.1} parent=0 // loop_exit
    _

</llo_original>
